<compile_context>
chip_gen: v7x
topology: tpu7x:2x2x1
jax: 0.10.0
libtpu: 0.0.40
codegen_flags: <defaults>
</compile_context>

<pallas_src>
import functools

import jax
import jax.numpy as jnp
import numpy as np
from jax import lax
from jax.experimental import pallas as pl
from jax.experimental.pallas import tpu as pltpu


# ----------------------------- Pallas kernel ------------------------------ #
def textrcnn_kernel(
    ids_ref,      # (S*B,)   int32  SMEM  scalar-prefetched token ids (time-major, flat)
    table_ref,    # (Vp, E)  f32    embedding table (rows padded to a multiple of 8)
    wih_ref,      # (2E, 8H) f32    merged input->gate weights (rows 0:E fwd, E:2E bwd)
    whh_ref,      # (2H, 8H) f32    merged block-diagonal hidden->gate weights
    b_ref,        # (1, 8H)  f32    merged bias (b_ih + b_hh), gate order [i, f, o, g]
    wfc_ref,      # (E+2H, C) f32   fc weight, feature order [embed, h_fwd, h_bwd]
    bfc_ref,      # (1, C)   f32
    out_ref,      # (B, C)   f32    log-softmax output
    emb_ref,      # scratch (S*B, 2E): [:, :E] = emb[t], [:, E:] = emb[S-1-t]
    *,
    seq_len,
    batch,
):
    S, B = seq_len, batch
    E = table_ref.shape[1]
    H8 = wih_ref.shape[1]
    H2 = H8 // 4          # combined (fwd|bwd) hidden width = 2H

    # ---- fused embedding gather (and time-reversed copy for the backward chain) ----
    for t in range(S):
        for bi in range(B):
            n = t * B + bi
            rn = (S - 1 - t) * B + bi
            row = table_ref[pl.ds(ids_ref[n], 1), :]          # (1, E) dynamic row load
            emb_ref[n:n + 1, 0:E] = row                       # forward-time slot
            emb_ref[rn:rn + 1, E:2 * E] = row                 # reversed-time slot

    emb2 = emb_ref[...]                                       # (S*B, 2E)

    # ---- hoisted input projection for BOTH directions + bias: one MXU pass ----
    # wih_ref maps rows 0:E -> forward gate lanes, rows E:2E -> backward gate lanes,
    # so gates_x[t*B:(t+1)*B] already contains fwd@t / bwd@(S-1-t) merged per lane.
    gates_x = (
        jnp.dot(emb2, wih_ref[...], preferred_element_type=jnp.float32)
        + b_ref[...]
    )                                                         # (S*B, 8H)

    # ---- max-pool over the embedded input (independent of the recurrence) ----
    pooled_e = emb2[0:B, 0:E]
    for t in range(1, S):
        pooled_e = jnp.maximum(pooled_e, emb2[t * B:(t + 1) * B, 0:E])
    pooled_e = jnp.maximum(pooled_e, 0.0)                     # ReLU once

    whh = whh_ref[...]                                        # (2H, 8H)

    # ---- fused bidirectional recurrence (fully unrolled, states live in vregs) ----
    # Combined layout: gates columns [i_f,i_b | f_f,f_b | o_f,o_b | g_f,g_b],
    # hidden/cell state [fwd | bwd] of width 2H (matches FC feature order).
    h = jnp.zeros((B, H2), jnp.float32)
    c = jnp.zeros((B, H2), jnp.float32)
    pooled_h = jnp.zeros((B, H2), jnp.float32)                # relu(max) == max(relu,0)

    for t in range(S):
        gx = gates_x[t * B:(t + 1) * B, :]                    # (B, 8H) contiguous slice

        # Single block-diagonal recurrent matmul for both directions.
        gates = gx + jnp.dot(h, whh, preferred_element_type=jnp.float32)

        # Gate order [i, f, o, g]: sigmoid over the first 6H lanes, tanh over last 2H.
        sg = jax.nn.sigmoid(gates[:, 0:3 * H2])
        g = jnp.tanh(gates[:, 3 * H2:4 * H2])
        i = sg[:, 0:H2]
        f = sg[:, H2:2 * H2]
        o = sg[:, 2 * H2:3 * H2]

        c = f * c + i * g
        h = o * jnp.tanh(c)

        # Running max pooling of the hidden state (ReLU folded into the zero init).
        pooled_h = jnp.maximum(pooled_h, h)

    # ---- FC over [embed | h_fwd, h_bwd] feature blocks + log_softmax ----
    logits = (
        jnp.dot(pooled_e, wfc_ref[0:E, :], preferred_element_type=jnp.float32)
        + jnp.dot(pooled_h, wfc_ref[E:E + H2, :], preferred_element_type=jnp.float32)
        + bfc_ref[...]
    )                                                         # (B, C)

    m = jnp.max(logits, axis=1, keepdims=True)
    z = logits - m
    lse = jnp.log(jnp.sum(jnp.exp(z), axis=1, keepdims=True))
    out_ref[...] = (z - lse).astype(out_ref.dtype)


# ------------------------ one-time parameter packing ------------------------ #
def _reorder_ifgo_to_ifog(a, H):
    """PyTorch gate order [i, f, g, o] -> kernel order [i, f, o, g]."""
    return jnp.concatenate(
        [a[..., 0:2 * H], a[..., 3 * H:4 * H], a[..., 2 * H:3 * H]], axis=-1)


def _interleave_dirs(a_f, a_b, H):
    """(.., 4H) fwd + (.., 4H) bwd -> (.., 8H) with per-gate interleaving
    [i_f, i_b, f_f, f_b, o_f, o_b, g_f, g_b]."""
    parts = []
    for k in range(4):
        parts.append(a_f[..., k * H:(k + 1) * H])
        parts.append(a_b[..., k * H:(k + 1) * H])
    return jnp.concatenate(parts, axis=-1)


def pack_params(params):
    """One-time repack of raw (PyTorch-layout) params into the kernel layout."""
    H = params["whh_f"].shape[0]

    wih_f = _reorder_ifgo_to_ifog(params["wih_f"], H)
    wih_b = _reorder_ifgo_to_ifog(params["wih_b"], H)
    whh_f = _reorder_ifgo_to_ifog(params["whh_f"], H)
    whh_b = _reorder_ifgo_to_ifog(params["whh_b"], H)
    b_f = _reorder_ifgo_to_ifog(params["b_f"], H)
    b_b = _reorder_ifgo_to_ifog(params["b_b"], H)

    zer_e = jnp.zeros_like(wih_f)
    zer_h = jnp.zeros_like(whh_f)

    # (2E, 8H): rows 0:E (emb at time t) feed forward gate lanes, rows E:2E (emb at
    # time S-1-t) feed backward gate lanes -> one matmul merges both directions.
    wih = jnp.concatenate(
        [_interleave_dirs(wih_f, zer_e, H), _interleave_dirs(zer_e, wih_b, H)], axis=0)
    # (2H, 8H): block-diagonal by direction over the combined [h_fwd | h_bwd] state.
    whh = jnp.concatenate(
        [_interleave_dirs(whh_f, zer_h, H), _interleave_dirs(zer_h, whh_b, H)], axis=0)
    b = _interleave_dirs(b_f, b_b, H)                                   # (1, 8H)

    # Pad the embedding table rows to a multiple of 8 (sublane alignment).
    table = params["embedding"].astype(jnp.float32)
    V, E = table.shape
    Vp = ((V + 7) // 8) * 8
    if Vp != V:
        table = jnp.concatenate([table, jnp.zeros((Vp - V, E), jnp.float32)], axis=0)

    return {
        "table": table,
        "wih": wih,
        "whh": whh,
        "b": b,
        "w_fc": params["w_fc"].astype(jnp.float32),
        "b_fc": params["b_fc"].astype(jnp.float32),
    }


# ------------------------------- wrapper ----------------------------------- #
@jax.jit
def textrcnn_forward(x_ids, packed):
    """x_ids: (S, B) int32 token ids (same convention as the PyTorch forward)."""
    S, B = x_ids.shape
    E = packed["table"].shape[1]
    C = packed["b_fc"].shape[-1]

    ids_flat = x_ids.reshape(S * B).astype(jnp.int32)

    dense = (packed["table"], packed["wih"], packed["whh"], packed["b"],
             packed["w_fc"], packed["b_fc"])

    def full_spec(a):
        return pl.BlockSpec(a.shape, lambda i, ids, _nd=a.ndim: (0,) * _nd)

    kernel = functools.partial(textrcnn_kernel, seq_len=S, batch=B)

    grid_spec = pltpu.PrefetchScalarGridSpec(
        num_scalar_prefetch=1,
        grid=(1,),
        in_specs=[full_spec(a) for a in dense],
        out_specs=pl.BlockSpec((B, C), lambda i, ids: (0, 0)),
        scratch_shapes=[pltpu.VMEM((S * B, 2 * E), jnp.float32)],
    )

    return pl.pallas_call(
        kernel,
        out_shape=jax.ShapeDtypeStruct((B, C), jnp.float32),
        grid_spec=grid_spec,
        compiler_params=pltpu.CompilerParams(
            dimension_semantics=("arbitrary",),
        ),
    )(ids_flat, *dense)


# --------------------------- pure-JAX reference ----------------------------- #
def textrcnn_reference(x_ids, params):
    emb = params["embedding"][x_ids]                # (S, B, E)
    H = params["whh_f"].shape[0]

    def make_step(wih, whh, b):
        def step(carry, x_t):
            h, c = carry
            gates = x_t @ wih + h @ whh + b[0]
            i = jax.nn.sigmoid(gates[:, 0:H])
            f = jax.nn.sigmoid(gates[:, H:2 * H])
            g = jnp.tanh(gates[:, 2 * H:3 * H])
            o = jax.nn.sigmoid(gates[:, 3 * H:4 * H])
            c = f * c + i * g
            h = o * jnp.tanh(c)
            return (h, c), h
        return step

    B = emb.shape[1]
    h0 = jnp.zeros((B, H), jnp.float32)
    _, hs_f = lax.scan(make_step(params["wih_f"], params["whh_f"], params["b_f"]),
                       (h0, h0), emb)
    _, hs_b = lax.scan(make_step(params["wih_b"], params["whh_b"], params["b_b"]),
                       (h0, h0), emb[::-1])
    hs_b = hs_b[::-1]

    feat = jnp.concatenate([emb, hs_f, hs_b], axis=-1)          # (S, B, E+2H)
    pooled = jnp.max(jax.nn.relu(feat), axis=0)                 # (B, E+2H)
    logits = pooled @ params["w_fc"] + params["b_fc"][0]
    return jax.nn.log_softmax(logits, axis=1)


# --------------------------------- main ------------------------------------ #
if __name__ == "__main__":
    S, B, E, H, V, C = 8, 2, 32, 32, 50, 4   # seq(=pad_size), batch, embed, hidden, vocab, classes

    key = jax.random.PRNGKey(0)
    ks = jax.random.split(key, 10)
    params = {
        "embedding": jax.random.normal(ks[0], (V, E), jnp.float32) * 0.5,
        "wih_f": jax.random.normal(ks[1], (E, 4 * H), jnp.float32) * 0.1,
        "whh_f": jax.random.normal(ks[2], (H, 4 * H), jnp.float32) * 0.1,
        "b_f":   jax.random.normal(ks[3], (1, 4 * H), jnp.float32) * 0.1,
        "wih_b": jax.random.normal(ks[4], (E, 4 * H), jnp.float32) * 0.1,
        "whh_b": jax.random.normal(ks[5], (H, 4 * H), jnp.float32) * 0.1,
        "b_b":   jax.random.normal(ks[6], (1, 4 * H), jnp.float32) * 0.1,
        "w_fc":  jax.random.normal(ks[7], (E + 2 * H, C), jnp.float32) * 0.1,
        "b_fc":  jax.random.normal(ks[8], (1, C), jnp.float32) * 0.1,
    }
    x_ids = jax.random.randint(ks[9], (S, B), 0, V, dtype=jnp.int32)

    # One-time repack; per-call work is just the jitted pallas_call.
    packed = jax.tree_util.tree_map(jax.block_until_ready, pack_params(params))

    out = textrcnn_forward(x_ids, packed)
    out = jax.block_until_ready(out)

    ref = jax.block_until_ready(textrcnn_reference(x_ids, params))
    np.testing.assert_allclose(np.asarray(out), np.asarray(ref), rtol=1e-4, atol=1e-4)

    print("KERNEL_OK")
</pallas_src>

<mosaic_0001>
module attributes {stable_mosaic.version = 11 : i64} {
  func.func @textrcnn_kernel(%arg0: i32, %arg1: memref<16xi32, #tpu.memory_space<smem>>, %arg2: memref<56x32xf32, #tpu.memory_space<vmem>>, %arg3: memref<64x256xf32, #tpu.memory_space<vmem>>, %arg4: memref<64x256xf32, #tpu.memory_space<vmem>>, %arg5: memref<1x256xf32, #tpu.memory_space<vmem>>, %arg6: memref<96x4xf32, #tpu.memory_space<vmem>>, %arg7: memref<1x4xf32, #tpu.memory_space<vmem>>, %arg8: memref<2x4xf32, #tpu.memory_space<vmem>>, %arg9: memref<16x64xf32, #tpu.memory_space<vmem>>) attributes {dimension_semantics = [#tpu.dimension_semantics<arbitrary>], iteration_bounds = array<i64: 1>, scalar_prefetch = 1 : i64, scratch_operands = 1 : i64, tpu.core_type = #tpu.core_type<tc>, window_params = [{pipeline_mode = #tpu.pipeline_mode<synchronous>, transform_indices = @transform_0, window_bounds = array<i64: 56, 32>}, {pipeline_mode = #tpu.pipeline_mode<synchronous>, transform_indices = @transform_1, window_bounds = array<i64: 64, 256>}, {pipeline_mode = #tpu.pipeline_mode<synchronous>, transform_indices = @transform_2, window_bounds = array<i64: 64, 256>}, {pipeline_mode = #tpu.pipeline_mode<synchronous>, transform_indices = @transform_3, window_bounds = array<i64: 1, 256>}, {pipeline_mode = #tpu.pipeline_mode<synchronous>, transform_indices = @transform_4, window_bounds = array<i64: 96, 4>}, {pipeline_mode = #tpu.pipeline_mode<synchronous>, transform_indices = @transform_5, window_bounds = array<i64: 1, 4>}, {pipeline_mode = #tpu.pipeline_mode<synchronous>, transform_indices = @transform_6, window_bounds = array<i64: 2, 4>}]} {
    %c0 = arith.constant 0 : index
    %0 = memref.load %arg1[%c0] : memref<16xi32, #tpu.memory_space<smem>>
    %1 = arith.index_cast %0 : i32 to index
    %c0_0 = arith.constant 0 : index
    %2 = vector.load %arg2[%1, %c0_0] : memref<56x32xf32, #tpu.memory_space<vmem>>, vector<1x32xf32>
    %c0_1 = arith.constant 0 : index
    %c0_2 = arith.constant 0 : index
    %3 = vector.load %arg9[%c0_1, %c0_2] : memref<16x64xf32, #tpu.memory_space<vmem>>, vector<1x32xf32>
    tpu.vector_store %arg9[%c0_1, %c0_2], %2 {strides = array<i32>} : memref<16x64xf32, #tpu.memory_space<vmem>>, vector<1x32xf32>,
    %c14 = arith.constant 14 : index
    %c32 = arith.constant 32 : index
    %4 = vector.load %arg9[%c14, %c32] : memref<16x64xf32, #tpu.memory_space<vmem>>, vector<1x32xf32>
    tpu.vector_store %arg9[%c14, %c32], %2 {strides = array<i32>} : memref<16x64xf32, #tpu.memory_space<vmem>>, vector<1x32xf32>,
    %c1 = arith.constant 1 : index
    %5 = memref.load %arg1[%c1] : memref<16xi32, #tpu.memory_space<smem>>
    %6 = arith.index_cast %5 : i32 to index
    %c0_3 = arith.constant 0 : index
    %7 = vector.load %arg2[%6, %c0_3] : memref<56x32xf32, #tpu.memory_space<vmem>>, vector<1x32xf32>
    %c1_4 = arith.constant 1 : index
    %c0_5 = arith.constant 0 : index
    %8 = vector.load %arg9[%c1_4, %c0_5] : memref<16x64xf32, #tpu.memory_space<vmem>>, vector<1x32xf32>
    tpu.vector_store %arg9[%c1_4, %c0_5], %7 {strides = array<i32>} : memref<16x64xf32, #tpu.memory_space<vmem>>, vector<1x32xf32>,
    %c15 = arith.constant 15 : index
    %c32_6 = arith.constant 32 : index
    %9 = vector.load %arg9[%c15, %c32_6] : memref<16x64xf32, #tpu.memory_space<vmem>>, vector<1x32xf32>
    tpu.vector_store %arg9[%c15, %c32_6], %7 {strides = array<i32>} : memref<16x64xf32, #tpu.memory_space<vmem>>, vector<1x32xf32>,
    %c2 = arith.constant 2 : index
    %10 = memref.load %arg1[%c2] : memref<16xi32, #tpu.memory_space<smem>>
    %11 = arith.index_cast %10 : i32 to index
    %c0_7 = arith.constant 0 : index
    %12 = vector.load %arg2[%11, %c0_7] : memref<56x32xf32, #tpu.memory_space<vmem>>, vector<1x32xf32>
    %c2_8 = arith.constant 2 : index
    %c0_9 = arith.constant 0 : index
    %13 = vector.load %arg9[%c2_8, %c0_9] : memref<16x64xf32, #tpu.memory_space<vmem>>, vector<1x32xf32>
    tpu.vector_store %arg9[%c2_8, %c0_9], %12 {strides = array<i32>} : memref<16x64xf32, #tpu.memory_space<vmem>>, vector<1x32xf32>,
    %c12 = arith.constant 12 : index
    %c32_10 = arith.constant 32 : index
    %14 = vector.load %arg9[%c12, %c32_10] : memref<16x64xf32, #tpu.memory_space<vmem>>, vector<1x32xf32>
    tpu.vector_store %arg9[%c12, %c32_10], %12 {strides = array<i32>} : memref<16x64xf32, #tpu.memory_space<vmem>>, vector<1x32xf32>,
    %c3 = arith.constant 3 : index
    %15 = memref.load %arg1[%c3] : memref<16xi32, #tpu.memory_space<smem>>
    %16 = arith.index_cast %15 : i32 to index
    %c0_11 = arith.constant 0 : index
    %17 = vector.load %arg2[%16, %c0_11] : memref<56x32xf32, #tpu.memory_space<vmem>>, vector<1x32xf32>
    %c3_12 = arith.constant 3 : index
    %c0_13 = arith.constant 0 : index
    %18 = vector.load %arg9[%c3_12, %c0_13] : memref<16x64xf32, #tpu.memory_space<vmem>>, vector<1x32xf32>
    tpu.vector_store %arg9[%c3_12, %c0_13], %17 {strides = array<i32>} : memref<16x64xf32, #tpu.memory_space<vmem>>, vector<1x32xf32>,
    %c13 = arith.constant 13 : index
    %c32_14 = arith.constant 32 : index
    %19 = vector.load %arg9[%c13, %c32_14] : memref<16x64xf32, #tpu.memory_space<vmem>>, vector<1x32xf32>
    tpu.vector_store %arg9[%c13, %c32_14], %17 {strides = array<i32>} : memref<16x64xf32, #tpu.memory_space<vmem>>, vector<1x32xf32>,
    %c4 = arith.constant 4 : index
    %20 = memref.load %arg1[%c4] : memref<16xi32, #tpu.memory_space<smem>>
    %21 = arith.index_cast %20 : i32 to index
    %c0_15 = arith.constant 0 : index
    %22 = vector.load %arg2[%21, %c0_15] : memref<56x32xf32, #tpu.memory_space<vmem>>, vector<1x32xf32>
    %c4_16 = arith.constant 4 : index
    %c0_17 = arith.constant 0 : index
    %23 = vector.load %arg9[%c4_16, %c0_17] : memref<16x64xf32, #tpu.memory_space<vmem>>, vector<1x32xf32>
    tpu.vector_store %arg9[%c4_16, %c0_17], %22 {strides = array<i32>} : memref<16x64xf32, #tpu.memory_space<vmem>>, vector<1x32xf32>,
    %c10 = arith.constant 10 : index
    %c32_18 = arith.constant 32 : index
    %24 = vector.load %arg9[%c10, %c32_18] : memref<16x64xf32, #tpu.memory_space<vmem>>, vector<1x32xf32>
    tpu.vector_store %arg9[%c10, %c32_18], %22 {strides = array<i32>} : memref<16x64xf32, #tpu.memory_space<vmem>>, vector<1x32xf32>,
    %c5 = arith.constant 5 : index
    %25 = memref.load %arg1[%c5] : memref<16xi32, #tpu.memory_space<smem>>
    %26 = arith.index_cast %25 : i32 to index
    %c0_19 = arith.constant 0 : index
    %27 = vector.load %arg2[%26, %c0_19] : memref<56x32xf32, #tpu.memory_space<vmem>>, vector<1x32xf32>
    %c5_20 = arith.constant 5 : index
    %c0_21 = arith.constant 0 : index
    %28 = vector.load %arg9[%c5_20, %c0_21] : memref<16x64xf32, #tpu.memory_space<vmem>>, vector<1x32xf32>
    tpu.vector_store %arg9[%c5_20, %c0_21], %27 {strides = array<i32>} : memref<16x64xf32, #tpu.memory_space<vmem>>, vector<1x32xf32>,
    %c11 = arith.constant 11 : index
    %c32_22 = arith.constant 32 : index
    %29 = vector.load %arg9[%c11, %c32_22] : memref<16x64xf32, #tpu.memory_space<vmem>>, vector<1x32xf32>
    tpu.vector_store %arg9[%c11, %c32_22], %27 {strides = array<i32>} : memref<16x64xf32, #tpu.memory_space<vmem>>, vector<1x32xf32>,
    %c6 = arith.constant 6 : index
    %30 = memref.load %arg1[%c6] : memref<16xi32, #tpu.memory_space<smem>>
    %31 = arith.index_cast %30 : i32 to index
    %c0_23 = arith.constant 0 : index
    %32 = vector.load %arg2[%31, %c0_23] : memref<56x32xf32, #tpu.memory_space<vmem>>, vector<1x32xf32>
    %c6_24 = arith.constant 6 : index
    %c0_25 = arith.constant 0 : index
    %33 = vector.load %arg9[%c6_24, %c0_25] : memref<16x64xf32, #tpu.memory_space<vmem>>, vector<1x32xf32>
    tpu.vector_store %arg9[%c6_24, %c0_25], %32 {strides = array<i32>} : memref<16x64xf32, #tpu.memory_space<vmem>>, vector<1x32xf32>,
    %c8 = arith.constant 8 : index
    %c32_26 = arith.constant 32 : index
    %34 = vector.load %arg9[%c8, %c32_26] : memref<16x64xf32, #tpu.memory_space<vmem>>, vector<1x32xf32>
    tpu.vector_store %arg9[%c8, %c32_26], %32 {strides = array<i32>} : memref<16x64xf32, #tpu.memory_space<vmem>>, vector<1x32xf32>,
    %c7 = arith.constant 7 : index
    %35 = memref.load %arg1[%c7] : memref<16xi32, #tpu.memory_space<smem>>
    %36 = arith.index_cast %35 : i32 to index
    %c0_27 = arith.constant 0 : index
    %37 = vector.load %arg2[%36, %c0_27] : memref<56x32xf32, #tpu.memory_space<vmem>>, vector<1x32xf32>
    %c7_28 = arith.constant 7 : index
    %c0_29 = arith.constant 0 : index
    %38 = vector.load %arg9[%c7_28, %c0_29] : memref<16x64xf32, #tpu.memory_space<vmem>>, vector<1x32xf32>
    tpu.vector_store %arg9[%c7_28, %c0_29], %37 {strides = array<i32>} : memref<16x64xf32, #tpu.memory_space<vmem>>, vector<1x32xf32>,
    %c9 = arith.constant 9 : index
    %c32_30 = arith.constant 32 : index
    %39 = vector.load %arg9[%c9, %c32_30] : memref<16x64xf32, #tpu.memory_space<vmem>>, vector<1x32xf32>
    tpu.vector_store %arg9[%c9, %c32_30], %37 {strides = array<i32>} : memref<16x64xf32, #tpu.memory_space<vmem>>, vector<1x32xf32>,
    %c8_31 = arith.constant 8 : index
    %40 = memref.load %arg1[%c8_31] : memref<16xi32, #tpu.memory_space<smem>>
    %41 = arith.index_cast %40 : i32 to index
    %c0_32 = arith.constant 0 : index
    %42 = vector.load %arg2[%41, %c0_32] : memref<56x32xf32, #tpu.memory_space<vmem>>, vector<1x32xf32>
    %c8_33 = arith.constant 8 : index
    %c0_34 = arith.constant 0 : index
    %43 = vector.load %arg9[%c8_33, %c0_34] : memref<16x64xf32, #tpu.memory_space<vmem>>, vector<1x32xf32>
    tpu.vector_store %arg9[%c8_33, %c0_34], %42 {strides = array<i32>} : memref<16x64xf32, #tpu.memory_space<vmem>>, vector<1x32xf32>,
    %c6_35 = arith.constant 6 : index
    %c32_36 = arith.constant 32 : index
    %44 = vector.load %arg9[%c6_35, %c32_36] : memref<16x64xf32, #tpu.memory_space<vmem>>, vector<1x32xf32>
    tpu.vector_store %arg9[%c6_35, %c32_36], %42 {strides = array<i32>} : memref<16x64xf32, #tpu.memory_space<vmem>>, vector<1x32xf32>,
    %c9_37 = arith.constant 9 : index
    %45 = memref.load %arg1[%c9_37] : memref<16xi32, #tpu.memory_space<smem>>
    %46 = arith.index_cast %45 : i32 to index
    %c0_38 = arith.constant 0 : index
    %47 = vector.load %arg2[%46, %c0_38] : memref<56x32xf32, #tpu.memory_space<vmem>>, vector<1x32xf32>
    %c9_39 = arith.constant 9 : index
    %c0_40 = arith.constant 0 : index
    %48 = vector.load %arg9[%c9_39, %c0_40] : memref<16x64xf32, #tpu.memory_space<vmem>>, vector<1x32xf32>
    tpu.vector_store %arg9[%c9_39, %c0_40], %47 {strides = array<i32>} : memref<16x64xf32, #tpu.memory_space<vmem>>, vector<1x32xf32>,
    %c7_41 = arith.constant 7 : index
    %c32_42 = arith.constant 32 : index
    %49 = vector.load %arg9[%c7_41, %c32_42] : memref<16x64xf32, #tpu.memory_space<vmem>>, vector<1x32xf32>
    tpu.vector_store %arg9[%c7_41, %c32_42], %47 {strides = array<i32>} : memref<16x64xf32, #tpu.memory_space<vmem>>, vector<1x32xf32>,
    %c10_43 = arith.constant 10 : index
    %50 = memref.load %arg1[%c10_43] : memref<16xi32, #tpu.memory_space<smem>>
    %51 = arith.index_cast %50 : i32 to index
    %c0_44 = arith.constant 0 : index
    %52 = vector.load %arg2[%51, %c0_44] : memref<56x32xf32, #tpu.memory_space<vmem>>, vector<1x32xf32>
    %c10_45 = arith.constant 10 : index
    %c0_46 = arith.constant 0 : index
    %53 = vector.load %arg9[%c10_45, %c0_46] : memref<16x64xf32, #tpu.memory_space<vmem>>, vector<1x32xf32>
    tpu.vector_store %arg9[%c10_45, %c0_46], %52 {strides = array<i32>} : memref<16x64xf32, #tpu.memory_space<vmem>>, vector<1x32xf32>,
    %c4_47 = arith.constant 4 : index
    %c32_48 = arith.constant 32 : index
    %54 = vector.load %arg9[%c4_47, %c32_48] : memref<16x64xf32, #tpu.memory_space<vmem>>, vector<1x32xf32>
    tpu.vector_store %arg9[%c4_47, %c32_48], %52 {strides = array<i32>} : memref<16x64xf32, #tpu.memory_space<vmem>>, vector<1x32xf32>,
    %c11_49 = arith.constant 11 : index
    %55 = memref.load %arg1[%c11_49] : memref<16xi32, #tpu.memory_space<smem>>
    %56 = arith.index_cast %55 : i32 to index
    %c0_50 = arith.constant 0 : index
    %57 = vector.load %arg2[%56, %c0_50] : memref<56x32xf32, #tpu.memory_space<vmem>>, vector<1x32xf32>
    %c11_51 = arith.constant 11 : index
    %c0_52 = arith.constant 0 : index
    %58 = vector.load %arg9[%c11_51, %c0_52] : memref<16x64xf32, #tpu.memory_space<vmem>>, vector<1x32xf32>
    tpu.vector_store %arg9[%c11_51, %c0_52], %57 {strides = array<i32>} : memref<16x64xf32, #tpu.memory_space<vmem>>, vector<1x32xf32>,
    %c5_53 = arith.constant 5 : index
    %c32_54 = arith.constant 32 : index
    %59 = vector.load %arg9[%c5_53, %c32_54] : memref<16x64xf32, #tpu.memory_space<vmem>>, vector<1x32xf32>
    tpu.vector_store %arg9[%c5_53, %c32_54], %57 {strides = array<i32>} : memref<16x64xf32, #tpu.memory_space<vmem>>, vector<1x32xf32>,
    %c12_55 = arith.constant 12 : index
    %60 = memref.load %arg1[%c12_55] : memref<16xi32, #tpu.memory_space<smem>>
    %61 = arith.index_cast %60 : i32 to index
    %c0_56 = arith.constant 0 : index
    %62 = vector.load %arg2[%61, %c0_56] : memref<56x32xf32, #tpu.memory_space<vmem>>, vector<1x32xf32>
    %c12_57 = arith.constant 12 : index
    %c0_58 = arith.constant 0 : index
    %63 = vector.load %arg9[%c12_57, %c0_58] : memref<16x64xf32, #tpu.memory_space<vmem>>, vector<1x32xf32>
    tpu.vector_store %arg9[%c12_57, %c0_58], %62 {strides = array<i32>} : memref<16x64xf32, #tpu.memory_space<vmem>>, vector<1x32xf32>,
    %c2_59 = arith.constant 2 : index
    %c32_60 = arith.constant 32 : index
    %64 = vector.load %arg9[%c2_59, %c32_60] : memref<16x64xf32, #tpu.memory_space<vmem>>, vector<1x32xf32>
    tpu.vector_store %arg9[%c2_59, %c32_60], %62 {strides = array<i32>} : memref<16x64xf32, #tpu.memory_space<vmem>>, vector<1x32xf32>,
    %c13_61 = arith.constant 13 : index
    %65 = memref.load %arg1[%c13_61] : memref<16xi32, #tpu.memory_space<smem>>
    %66 = arith.index_cast %65 : i32 to index
    %c0_62 = arith.constant 0 : index
    %67 = vector.load %arg2[%66, %c0_62] : memref<56x32xf32, #tpu.memory_space<vmem>>, vector<1x32xf32>
    %c13_63 = arith.constant 13 : index
    %c0_64 = arith.constant 0 : index
    %68 = vector.load %arg9[%c13_63, %c0_64] : memref<16x64xf32, #tpu.memory_space<vmem>>, vector<1x32xf32>
    tpu.vector_store %arg9[%c13_63, %c0_64], %67 {strides = array<i32>} : memref<16x64xf32, #tpu.memory_space<vmem>>, vector<1x32xf32>,
    %c3_65 = arith.constant 3 : index
    %c32_66 = arith.constant 32 : index
    %69 = vector.load %arg9[%c3_65, %c32_66] : memref<16x64xf32, #tpu.memory_space<vmem>>, vector<1x32xf32>
    tpu.vector_store %arg9[%c3_65, %c32_66], %67 {strides = array<i32>} : memref<16x64xf32, #tpu.memory_space<vmem>>, vector<1x32xf32>,
    %c14_67 = arith.constant 14 : index
    %70 = memref.load %arg1[%c14_67] : memref<16xi32, #tpu.memory_space<smem>>
    %71 = arith.index_cast %70 : i32 to index
    %c0_68 = arith.constant 0 : index
    %72 = vector.load %arg2[%71, %c0_68] : memref<56x32xf32, #tpu.memory_space<vmem>>, vector<1x32xf32>
    %c14_69 = arith.constant 14 : index
    %c0_70 = arith.constant 0 : index
    %73 = vector.load %arg9[%c14_69, %c0_70] : memref<16x64xf32, #tpu.memory_space<vmem>>, vector<1x32xf32>
    tpu.vector_store %arg9[%c14_69, %c0_70], %72 {strides = array<i32>} : memref<16x64xf32, #tpu.memory_space<vmem>>, vector<1x32xf32>,
    %c0_71 = arith.constant 0 : index
    %c32_72 = arith.constant 32 : index
    %74 = vector.load %arg9[%c0_71, %c32_72] : memref<16x64xf32, #tpu.memory_space<vmem>>, vector<1x32xf32>
    tpu.vector_store %arg9[%c0_71, %c32_72], %72 {strides = array<i32>} : memref<16x64xf32, #tpu.memory_space<vmem>>, vector<1x32xf32>,
    %c15_73 = arith.constant 15 : index
    %75 = memref.load %arg1[%c15_73] : memref<16xi32, #tpu.memory_space<smem>>
    %76 = arith.index_cast %75 : i32 to index
    %c0_74 = arith.constant 0 : index
    %77 = vector.load %arg2[%76, %c0_74] : memref<56x32xf32, #tpu.memory_space<vmem>>, vector<1x32xf32>
    %c15_75 = arith.constant 15 : index
    %c0_76 = arith.constant 0 : index
    %78 = vector.load %arg9[%c15_75, %c0_76] : memref<16x64xf32, #tpu.memory_space<vmem>>, vector<1x32xf32>
    tpu.vector_store %arg9[%c15_75, %c0_76], %77 {strides = array<i32>} : memref<16x64xf32, #tpu.memory_space<vmem>>, vector<1x32xf32>,
    %c1_77 = arith.constant 1 : index
    %c32_78 = arith.constant 32 : index
    %79 = vector.load %arg9[%c1_77, %c32_78] : memref<16x64xf32, #tpu.memory_space<vmem>>, vector<1x32xf32>
    tpu.vector_store %arg9[%c1_77, %c32_78], %77 {strides = array<i32>} : memref<16x64xf32, #tpu.memory_space<vmem>>, vector<1x32xf32>,
    %c0_79 = arith.constant 0 : index
    %c0_80 = arith.constant 0 : index
    %80 = vector.load %arg9[%c0_79, %c0_80] : memref<16x64xf32, #tpu.memory_space<vmem>>, vector<16x64xf32>
    %c0_81 = arith.constant 0 : index
    %c0_82 = arith.constant 0 : index
    %81 = vector.load %arg3[%c0_81, %c0_82] : memref<64x256xf32, #tpu.memory_space<vmem>>, vector<64x256xf32>
    %cst = arith.constant dense<0.000000e+00> : vector<16x256xf32>
    %82 = tpu.matmul %80, %81, %cst {dimension_numbers = #tpu.dot_dimension_numbers<[1], [0], [0], [1], [0, 0, 1, 1], [], []>} : vector<16x64xf32>, vector<64x256xf32>, vector<16x256xf32> -> vector<16x256xf32>
    %c0_83 = arith.constant 0 : index
    %c0_84 = arith.constant 0 : index
    %83 = vector.load %arg5[%c0_83, %c0_84] : memref<1x256xf32, #tpu.memory_space<vmem>>, vector<1x256xf32>
    %84 = vector.broadcast %83 : vector<1x256xf32> to vector<16x256xf32>
    %85 = arith.addf %82, %84 : vector<16x256xf32>
    %86 = vector.extract_strided_slice %80 {offsets = [0, 0], sizes = [2, 32], strides = [1, 1]} : vector<16x64xf32> to vector<2x32xf32>
    %87 = vector.extract_strided_slice %80 {offsets = [2, 0], sizes = [2, 32], strides = [1, 1]} : vector<16x64xf32> to vector<2x32xf32>
    %88 = arith.maximumf %86, %87 : vector<2x32xf32>
    %89 = vector.extract_strided_slice %80 {offsets = [4, 0], sizes = [2, 32], strides = [1, 1]} : vector<16x64xf32> to vector<2x32xf32>
    %90 = arith.maximumf %88, %89 : vector<2x32xf32>
    %91 = vector.extract_strided_slice %80 {offsets = [6, 0], sizes = [2, 32], strides = [1, 1]} : vector<16x64xf32> to vector<2x32xf32>
    %92 = arith.maximumf %90, %91 : vector<2x32xf32>
    %93 = vector.extract_strided_slice %80 {offsets = [8, 0], sizes = [2, 32], strides = [1, 1]} : vector<16x64xf32> to vector<2x32xf32>
    %94 = arith.maximumf %92, %93 : vector<2x32xf32>
    %95 = vector.extract_strided_slice %80 {offsets = [10, 0], sizes = [2, 32], strides = [1, 1]} : vector<16x64xf32> to vector<2x32xf32>
    %96 = arith.maximumf %94, %95 : vector<2x32xf32>
    %97 = vector.extract_strided_slice %80 {offsets = [12, 0], sizes = [2, 32], strides = [1, 1]} : vector<16x64xf32> to vector<2x32xf32>
    %98 = arith.maximumf %96, %97 : vector<2x32xf32>
    %99 = vector.extract_strided_slice %80 {offsets = [14, 0], sizes = [2, 32], strides = [1, 1]} : vector<16x64xf32> to vector<2x32xf32>
    %100 = arith.maximumf %98, %99 : vector<2x32xf32>
    %cst_85 = arith.constant 0.000000e+00 : f32
    %101 = vector.broadcast %cst_85 : f32 to vector<2x32xf32>
    %102 = arith.maximumf %100, %101 : vector<2x32xf32>
    %c0_86 = arith.constant 0 : index
    %c0_87 = arith.constant 0 : index
    %103 = vector.load %arg4[%c0_86, %c0_87] : memref<64x256xf32, #tpu.memory_space<vmem>>, vector<64x256xf32>
    %cst_88 = arith.constant 0.000000e+00 : f32
    %104 = vector.broadcast %cst_88 : f32 to vector<2x64xf32>
    %cst_89 = arith.constant 0.000000e+00 : f32
    %105 = vector.broadcast %cst_89 : f32 to vector<2x64xf32>
    %cst_90 = arith.constant 0.000000e+00 : f32
    %106 = vector.broadcast %cst_90 : f32 to vector<2x64xf32>
    %107 = vector.extract_strided_slice %85 {offsets = [0, 0], sizes = [2, 256], strides = [1, 1]} : vector<16x256xf32> to vector<2x256xf32>
    %cst_91 = arith.constant dense<0.000000e+00> : vector<2x256xf32>
    %108 = tpu.matmul %104, %103, %cst_91 {dimension_numbers = #tpu.dot_dimension_numbers<[1], [0], [0], [1], [0, 0, 1, 1], [], []>} : vector<2x64xf32>, vector<64x256xf32>, vector<2x256xf32> -> vector<2x256xf32>
    %109 = arith.addf %107, %108 : vector<2x256xf32>
    %110 = vector.extract_strided_slice %109 {offsets = [0, 0], sizes = [2, 192], strides = [1, 1]} : vector<2x256xf32> to vector<2x192xf32>
    %111 = arith.negf %110 : vector<2x192xf32>
    %112 = math.exp %111 : vector<2x192xf32>
    %cst_92 = arith.constant 1.000000e+00 : f32
    %113 = vector.broadcast %cst_92 : f32 to vector<2x192xf32>
    %114 = arith.addf %113, %112 : vector<2x192xf32>
    %115 = arith.divf %113, %114 : vector<2x192xf32>
    %116 = vector.extract_strided_slice %109 {offsets = [0, 192], sizes = [2, 64], strides = [1, 1]} : vector<2x256xf32> to vector<2x64xf32>
    %117 = math.tanh %116 : vector<2x64xf32>
    %118 = vector.extract_strided_slice %115 {offsets = [0, 0], sizes = [2, 64], strides = [1, 1]} : vector<2x192xf32> to vector<2x64xf32>
    %119 = vector.extract_strided_slice %115 {offsets = [0, 64], sizes = [2, 64], strides = [1, 1]} : vector<2x192xf32> to vector<2x64xf32>
    %120 = vector.extract_strided_slice %115 {offsets = [0, 128], sizes = [2, 64], strides = [1, 1]} : vector<2x192xf32> to vector<2x64xf32>
    %121 = arith.mulf %119, %105 : vector<2x64xf32>
    %122 = arith.mulf %118, %117 : vector<2x64xf32>
    %123 = arith.addf %121, %122 : vector<2x64xf32>
    %124 = math.tanh %123 : vector<2x64xf32>
    %125 = arith.mulf %120, %124 : vector<2x64xf32>
    %126 = arith.maximumf %106, %125 : vector<2x64xf32>
    %127 = vector.extract_strided_slice %85 {offsets = [2, 0], sizes = [2, 256], strides = [1, 1]} : vector<16x256xf32> to vector<2x256xf32>
    %cst_93 = arith.constant dense<0.000000e+00> : vector<2x256xf32>
    %128 = tpu.matmul %125, %103, %cst_93 {dimension_numbers = #tpu.dot_dimension_numbers<[1], [0], [0], [1], [0, 0, 1, 1], [], []>} : vector<2x64xf32>, vector<64x256xf32>, vector<2x256xf32> -> vector<2x256xf32>
    %129 = arith.addf %127, %128 : vector<2x256xf32>
    %130 = vector.extract_strided_slice %129 {offsets = [0, 0], sizes = [2, 192], strides = [1, 1]} : vector<2x256xf32> to vector<2x192xf32>
    %131 = arith.negf %130 : vector<2x192xf32>
    %132 = math.exp %131 : vector<2x192xf32>
    %cst_94 = arith.constant 1.000000e+00 : f32
    %133 = vector.broadcast %cst_94 : f32 to vector<2x192xf32>
    %134 = arith.addf %133, %132 : vector<2x192xf32>
    %135 = arith.divf %133, %134 : vector<2x192xf32>
    %136 = vector.extract_strided_slice %129 {offsets = [0, 192], sizes = [2, 64], strides = [1, 1]} : vector<2x256xf32> to vector<2x64xf32>
    %137 = math.tanh %136 : vector<2x64xf32>
    %138 = vector.extract_strided_slice %135 {offsets = [0, 0], sizes = [2, 64], strides = [1, 1]} : vector<2x192xf32> to vector<2x64xf32>
    %139 = vector.extract_strided_slice %135 {offsets = [0, 64], sizes = [2, 64], strides = [1, 1]} : vector<2x192xf32> to vector<2x64xf32>
    %140 = vector.extract_strided_slice %135 {offsets = [0, 128], sizes = [2, 64], strides = [1, 1]} : vector<2x192xf32> to vector<2x64xf32>
    %141 = arith.mulf %139, %123 : vector<2x64xf32>
    %142 = arith.mulf %138, %137 : vector<2x64xf32>
    %143 = arith.addf %141, %142 : vector<2x64xf32>
    %144 = math.tanh %143 : vector<2x64xf32>
    %145 = arith.mulf %140, %144 : vector<2x64xf32>
    %146 = arith.maximumf %126, %145 : vector<2x64xf32>
    %147 = vector.extract_strided_slice %85 {offsets = [4, 0], sizes = [2, 256], strides = [1, 1]} : vector<16x256xf32> to vector<2x256xf32>
    %cst_95 = arith.constant dense<0.000000e+00> : vector<2x256xf32>
    %148 = tpu.matmul %145, %103, %cst_95 {dimension_numbers = #tpu.dot_dimension_numbers<[1], [0], [0], [1], [0, 0, 1, 1], [], []>} : vector<2x64xf32>, vector<64x256xf32>, vector<2x256xf32> -> vector<2x256xf32>
    %149 = arith.addf %147, %148 : vector<2x256xf32>
    %150 = vector.extract_strided_slice %149 {offsets = [0, 0], sizes = [2, 192], strides = [1, 1]} : vector<2x256xf32> to vector<2x192xf32>
    %151 = arith.negf %150 : vector<2x192xf32>
    %152 = math.exp %151 : vector<2x192xf32>
    %cst_96 = arith.constant 1.000000e+00 : f32
    %153 = vector.broadcast %cst_96 : f32 to vector<2x192xf32>
    %154 = arith.addf %153, %152 : vector<2x192xf32>
    %155 = arith.divf %153, %154 : vector<2x192xf32>
    %156 = vector.extract_strided_slice %149 {offsets = [0, 192], sizes = [2, 64], strides = [1, 1]} : vector<2x256xf32> to vector<2x64xf32>
    %157 = math.tanh %156 : vector<2x64xf32>
    %158 = vector.extract_strided_slice %155 {offsets = [0, 0], sizes = [2, 64], strides = [1, 1]} : vector<2x192xf32> to vector<2x64xf32>
    %159 = vector.extract_strided_slice %155 {offsets = [0, 64], sizes = [2, 64], strides = [1, 1]} : vector<2x192xf32> to vector<2x64xf32>
    %160 = vector.extract_strided_slice %155 {offsets = [0, 128], sizes = [2, 64], strides = [1, 1]} : vector<2x192xf32> to vector<2x64xf32>
    %161 = arith.mulf %159, %143 : vector<2x64xf32>
    %162 = arith.mulf %158, %157 : vector<2x64xf32>
    %163 = arith.addf %161, %162 : vector<2x64xf32>
    %164 = math.tanh %163 : vector<2x64xf32>
    %165 = arith.mulf %160, %164 : vector<2x64xf32>
    %166 = arith.maximumf %146, %165 : vector<2x64xf32>
    %167 = vector.extract_strided_slice %85 {offsets = [6, 0], sizes = [2, 256], strides = [1, 1]} : vector<16x256xf32> to vector<2x256xf32>
    %cst_97 = arith.constant dense<0.000000e+00> : vector<2x256xf32>
    %168 = tpu.matmul %165, %103, %cst_97 {dimension_numbers = #tpu.dot_dimension_numbers<[1], [0], [0], [1], [0, 0, 1, 1], [], []>} : vector<2x64xf32>, vector<64x256xf32>, vector<2x256xf32> -> vector<2x256xf32>
    %169 = arith.addf %167, %168 : vector<2x256xf32>
    %170 = vector.extract_strided_slice %169 {offsets = [0, 0], sizes = [2, 192], strides = [1, 1]} : vector<2x256xf32> to vector<2x192xf32>
    %171 = arith.negf %170 : vector<2x192xf32>
    %172 = math.exp %171 : vector<2x192xf32>
    %cst_98 = arith.constant 1.000000e+00 : f32
    %173 = vector.broadcast %cst_98 : f32 to vector<2x192xf32>
    %174 = arith.addf %173, %172 : vector<2x192xf32>
    %175 = arith.divf %173, %174 : vector<2x192xf32>
    %176 = vector.extract_strided_slice %169 {offsets = [0, 192], sizes = [2, 64], strides = [1, 1]} : vector<2x256xf32> to vector<2x64xf32>
    %177 = math.tanh %176 : vector<2x64xf32>
    %178 = vector.extract_strided_slice %175 {offsets = [0, 0], sizes = [2, 64], strides = [1, 1]} : vector<2x192xf32> to vector<2x64xf32>
    %179 = vector.extract_strided_slice %175 {offsets = [0, 64], sizes = [2, 64], strides = [1, 1]} : vector<2x192xf32> to vector<2x64xf32>
    %180 = vector.extract_strided_slice %175 {offsets = [0, 128], sizes = [2, 64], strides = [1, 1]} : vector<2x192xf32> to vector<2x64xf32>
    %181 = arith.mulf %179, %163 : vector<2x64xf32>
    %182 = arith.mulf %178, %177 : vector<2x64xf32>
    %183 = arith.addf %181, %182 : vector<2x64xf32>
    %184 = math.tanh %183 : vector<2x64xf32>
    %185 = arith.mulf %180, %184 : vector<2x64xf32>
    %186 = arith.maximumf %166, %185 : vector<2x64xf32>
    %187 = vector.extract_strided_slice %85 {offsets = [8, 0], sizes = [2, 256], strides = [1, 1]} : vector<16x256xf32> to vector<2x256xf32>
    %cst_99 = arith.constant dense<0.000000e+00> : vector<2x256xf32>
    %188 = tpu.matmul %185, %103, %cst_99 {dimension_numbers = #tpu.dot_dimension_numbers<[1], [0], [0], [1], [0, 0, 1, 1], [], []>} : vector<2x64xf32>, vector<64x256xf32>, vector<2x256xf32> -> vector<2x256xf32>
    %189 = arith.addf %187, %188 : vector<2x256xf32>
    %190 = vector.extract_strided_slice %189 {offsets = [0, 0], sizes = [2, 192], strides = [1, 1]} : vector<2x256xf32> to vector<2x192xf32>
    %191 = arith.negf %190 : vector<2x192xf32>
    %192 = math.exp %191 : vector<2x192xf32>
    %cst_100 = arith.constant 1.000000e+00 : f32
    %193 = vector.broadcast %cst_100 : f32 to vector<2x192xf32>
    %194 = arith.addf %193, %192 : vector<2x192xf32>
    %195 = arith.divf %193, %194 : vector<2x192xf32>
    %196 = vector.extract_strided_slice %189 {offsets = [0, 192], sizes = [2, 64], strides = [1, 1]} : vector<2x256xf32> to vector<2x64xf32>
    %197 = math.tanh %196 : vector<2x64xf32>
    %198 = vector.extract_strided_slice %195 {offsets = [0, 0], sizes = [2, 64], strides = [1, 1]} : vector<2x192xf32> to vector<2x64xf32>
    %199 = vector.extract_strided_slice %195 {offsets = [0, 64], sizes = [2, 64], strides = [1, 1]} : vector<2x192xf32> to vector<2x64xf32>
    %200 = vector.extract_strided_slice %195 {offsets = [0, 128], sizes = [2, 64], strides = [1, 1]} : vector<2x192xf32> to vector<2x64xf32>
    %201 = arith.mulf %199, %183 : vector<2x64xf32>
    %202 = arith.mulf %198, %197 : vector<2x64xf32>
    %203 = arith.addf %201, %202 : vector<2x64xf32>
    %204 = math.tanh %203 : vector<2x64xf32>
    %205 = arith.mulf %200, %204 : vector<2x64xf32>
    %206 = arith.maximumf %186, %205 : vector<2x64xf32>
    %207 = vector.extract_strided_slice %85 {offsets = [10, 0], sizes = [2, 256], strides = [1, 1]} : vector<16x256xf32> to vector<2x256xf32>
    %cst_101 = arith.constant dense<0.000000e+00> : vector<2x256xf32>
    %208 = tpu.matmul %205, %103, %cst_101 {dimension_numbers = #tpu.dot_dimension_numbers<[1], [0], [0], [1], [0, 0, 1, 1], [], []>} : vector<2x64xf32>, vector<64x256xf32>, vector<2x256xf32> -> vector<2x256xf32>
    %209 = arith.addf %207, %208 : vector<2x256xf32>
    %210 = vector.extract_strided_slice %209 {offsets = [0, 0], sizes = [2, 192], strides = [1, 1]} : vector<2x256xf32> to vector<2x192xf32>
    %211 = arith.negf %210 : vector<2x192xf32>
    %212 = math.exp %211 : vector<2x192xf32>
    %cst_102 = arith.constant 1.000000e+00 : f32
    %213 = vector.broadcast %cst_102 : f32 to vector<2x192xf32>
    %214 = arith.addf %213, %212 : vector<2x192xf32>
    %215 = arith.divf %213, %214 : vector<2x192xf32>
    %216 = vector.extract_strided_slice %209 {offsets = [0, 192], sizes = [2, 64], strides = [1, 1]} : vector<2x256xf32> to vector<2x64xf32>
    %217 = math.tanh %216 : vector<2x64xf32>
    %218 = vector.extract_strided_slice %215 {offsets = [0, 0], sizes = [2, 64], strides = [1, 1]} : vector<2x192xf32> to vector<2x64xf32>
    %219 = vector.extract_strided_slice %215 {offsets = [0, 64], sizes = [2, 64], strides = [1, 1]} : vector<2x192xf32> to vector<2x64xf32>
    %220 = vector.extract_strided_slice %215 {offsets = [0, 128], sizes = [2, 64], strides = [1, 1]} : vector<2x192xf32> to vector<2x64xf32>
    %221 = arith.mulf %219, %203 : vector<2x64xf32>
    %222 = arith.mulf %218, %217 : vector<2x64xf32>
    %223 = arith.addf %221, %222 : vector<2x64xf32>
    %224 = math.tanh %223 : vector<2x64xf32>
    %225 = arith.mulf %220, %224 : vector<2x64xf32>
    %226 = arith.maximumf %206, %225 : vector<2x64xf32>
    %227 = vector.extract_strided_slice %85 {offsets = [12, 0], sizes = [2, 256], strides = [1, 1]} : vector<16x256xf32> to vector<2x256xf32>
    %cst_103 = arith.constant dense<0.000000e+00> : vector<2x256xf32>
    %228 = tpu.matmul %225, %103, %cst_103 {dimension_numbers = #tpu.dot_dimension_numbers<[1], [0], [0], [1], [0, 0, 1, 1], [], []>} : vector<2x64xf32>, vector<64x256xf32>, vector<2x256xf32> -> vector<2x256xf32>
    %229 = arith.addf %227, %228 : vector<2x256xf32>
    %230 = vector.extract_strided_slice %229 {offsets = [0, 0], sizes = [2, 192], strides = [1, 1]} : vector<2x256xf32> to vector<2x192xf32>
    %231 = arith.negf %230 : vector<2x192xf32>
    %232 = math.exp %231 : vector<2x192xf32>
    %cst_104 = arith.constant 1.000000e+00 : f32
    %233 = vector.broadcast %cst_104 : f32 to vector<2x192xf32>
    %234 = arith.addf %233, %232 : vector<2x192xf32>
    %235 = arith.divf %233, %234 : vector<2x192xf32>
    %236 = vector.extract_strided_slice %229 {offsets = [0, 192], sizes = [2, 64], strides = [1, 1]} : vector<2x256xf32> to vector<2x64xf32>
    %237 = math.tanh %236 : vector<2x64xf32>
    %238 = vector.extract_strided_slice %235 {offsets = [0, 0], sizes = [2, 64], strides = [1, 1]} : vector<2x192xf32> to vector<2x64xf32>
    %239 = vector.extract_strided_slice %235 {offsets = [0, 64], sizes = [2, 64], strides = [1, 1]} : vector<2x192xf32> to vector<2x64xf32>
    %240 = vector.extract_strided_slice %235 {offsets = [0, 128], sizes = [2, 64], strides = [1, 1]} : vector<2x192xf32> to vector<2x64xf32>
    %241 = arith.mulf %239, %223 : vector<2x64xf32>
    %242 = arith.mulf %238, %237 : vector<2x64xf32>
    %243 = arith.addf %241, %242 : vector<2x64xf32>
    %244 = math.tanh %243 : vector<2x64xf32>
    %245 = arith.mulf %240, %244 : vector<2x64xf32>
    %246 = arith.maximumf %226, %245 : vector<2x64xf32>
    %247 = vector.extract_strided_slice %85 {offsets = [14, 0], sizes = [2, 256], strides = [1, 1]} : vector<16x256xf32> to vector<2x256xf32>
    %cst_105 = arith.constant dense<0.000000e+00> : vector<2x256xf32>
    %248 = tpu.matmul %245, %103, %cst_105 {dimension_numbers = #tpu.dot_dimension_numbers<[1], [0], [0], [1], [0, 0, 1, 1], [], []>} : vector<2x64xf32>, vector<64x256xf32>, vector<2x256xf32> -> vector<2x256xf32>
    %249 = arith.addf %247, %248 : vector<2x256xf32>
    %250 = vector.extract_strided_slice %249 {offsets = [0, 0], sizes = [2, 192], strides = [1, 1]} : vector<2x256xf32> to vector<2x192xf32>
    %251 = arith.negf %250 : vector<2x192xf32>
    %252 = math.exp %251 : vector<2x192xf32>
    %cst_106 = arith.constant 1.000000e+00 : f32
    %253 = vector.broadcast %cst_106 : f32 to vector<2x192xf32>
    %254 = arith.addf %253, %252 : vector<2x192xf32>
    %255 = arith.divf %253, %254 : vector<2x192xf32>
    %256 = vector.extract_strided_slice %249 {offsets = [0, 192], sizes = [2, 64], strides = [1, 1]} : vector<2x256xf32> to vector<2x64xf32>
    %257 = math.tanh %256 : vector<2x64xf32>
    %258 = vector.extract_strided_slice %255 {offsets = [0, 0], sizes = [2, 64], strides = [1, 1]} : vector<2x192xf32> to vector<2x64xf32>
    %259 = vector.extract_strided_slice %255 {offsets = [0, 64], sizes = [2, 64], strides = [1, 1]} : vector<2x192xf32> to vector<2x64xf32>
    %260 = vector.extract_strided_slice %255 {offsets = [0, 128], sizes = [2, 64], strides = [1, 1]} : vector<2x192xf32> to vector<2x64xf32>
    %261 = arith.mulf %259, %243 : vector<2x64xf32>
    %262 = arith.mulf %258, %257 : vector<2x64xf32>
    %263 = arith.addf %261, %262 : vector<2x64xf32>
    %264 = math.tanh %263 : vector<2x64xf32>
    %265 = arith.mulf %260, %264 : vector<2x64xf32>
    %266 = arith.maximumf %246, %265 : vector<2x64xf32>
    %c0_107 = arith.constant 0 : index
    %c0_108 = arith.constant 0 : index
    %267 = vector.load %arg6[%c0_107, %c0_108] : memref<96x4xf32, #tpu.memory_space<vmem>>, vector<32x4xf32>
    %cst_109 = arith.constant dense<0.000000e+00> : vector<2x4xf32>
    %268 = tpu.matmul %102, %267, %cst_109 {dimension_numbers = #tpu.dot_dimension_numbers<[1], [0], [0], [1], [0, 0, 1, 1], [], []>} : vector<2x32xf32>, vector<32x4xf32>, vector<2x4xf32> -> vector<2x4xf32>
    %c32_110 = arith.constant 32 : index
    %c0_111 = arith.constant 0 : index
    %269 = vector.load %arg6[%c32_110, %c0_111] : memref<96x4xf32, #tpu.memory_space<vmem>>, vector<64x4xf32>
    %cst_112 = arith.constant dense<0.000000e+00> : vector<2x4xf32>
    %270 = tpu.matmul %266, %269, %cst_112 {dimension_numbers = #tpu.dot_dimension_numbers<[1], [0], [0], [1], [0, 0, 1, 1], [], []>} : vector<2x64xf32>, vector<64x4xf32>, vector<2x4xf32> -> vector<2x4xf32>
    %271 = arith.addf %268, %270 : vector<2x4xf32>
    %c0_113 = arith.constant 0 : index
    %c0_114 = arith.constant 0 : index
    %272 = vector.load %arg7[%c0_113, %c0_114] : memref<1x4xf32, #tpu.memory_space<vmem>>, vector<1x4xf32>
    %273 = vector.broadcast %272 : vector<1x4xf32> to vector<2x4xf32>
    %274 = arith.addf %271, %273 : vector<2x4xf32>
    %cst_115 = arith.constant dense<0xFF800000> : vector<2xf32>
    %275 = vector.multi_reduction <maximumf>, %274, %cst_115 [1] : vector<2x4xf32> to vector<2xf32>
    %276 = vector.shape_cast %275 : vector<2xf32> to vector<2x1xf32>
    %277 = vector.broadcast %276 : vector<2x1xf32> to vector<2x4xf32>
    %278 = arith.subf %274, %277 : vector<2x4xf32>
    %279 = math.exp %278 : vector<2x4xf32>
    %cst_116 = arith.constant dense<0.000000e+00> : vector<2xf32>
    %280 = vector.multi_reduction <add>, %279, %cst_116 [1] : vector<2x4xf32> to vector<2xf32>
    %281 = vector.shape_cast %280 : vector<2xf32> to vector<2x1xf32>
    %282 = math.log %281 : vector<2x1xf32>
    %283 = vector.broadcast %282 : vector<2x1xf32> to vector<2x4xf32>
    %284 = arith.subf %278, %283 : vector<2x4xf32>
    %c0_117 = arith.constant 0 : index
    %c0_118 = arith.constant 0 : index
    %285 = vector.load %arg8[%c0_117, %c0_118] : memref<2x4xf32, #tpu.memory_space<vmem>>, vector<2x4xf32>
    tpu.vector_store %arg8[%c0_117, %c0_118], %284 {strides = array<i32>} : memref<2x4xf32, #tpu.memory_space<vmem>>, vector<2x4xf32>,
    return
  }
  func.func @transform_0(%arg0: i32, %arg1: memref<16xi32, #tpu.memory_space<smem>>) -> (i32, i32) {
    %c0_i32 = arith.constant 0 : i32
    %c0_i32_0 = arith.constant 0 : i32
    %c0_i32_1 = arith.constant 0 : i32
    return %c0_i32, %c0_i32_0 : i32, i32
  }
  func.func @transform_1(%arg0: i32, %arg1: memref<16xi32, #tpu.memory_space<smem>>) -> (i32, i32) {
    %c0_i32 = arith.constant 0 : i32
    %c0_i32_0 = arith.constant 0 : i32
    %c0_i32_1 = arith.constant 0 : i32
    return %c0_i32, %c0_i32_0 : i32, i32
  }
  func.func @transform_2(%arg0: i32, %arg1: memref<16xi32, #tpu.memory_space<smem>>) -> (i32, i32) {
    %c0_i32 = arith.constant 0 : i32
    %c0_i32_0 = arith.constant 0 : i32
    %c0_i32_1 = arith.constant 0 : i32
    return %c0_i32, %c0_i32_0 : i32, i32
  }
  func.func @transform_3(%arg0: i32, %arg1: memref<16xi32, #tpu.memory_space<smem>>) -> (i32, i32) {
    %c0_i32 = arith.constant 0 : i32
    %c0_i32_0 = arith.constant 0 : i32
    %c0_i32_1 = arith.constant 0 : i32
    return %c0_i32, %c0_i32_0 : i32, i32
  }
  func.func @transform_4(%arg0: i32, %arg1: memref<16xi32, #tpu.memory_space<smem>>) -> (i32, i32) {
    %c0_i32 = arith.constant 0 : i32
    %c0_i32_0 = arith.constant 0 : i32
    %c0_i32_1 = arith.constant 0 : i32
    return %c0_i32, %c0_i32_0 : i32, i32
  }
  func.func @transform_5(%arg0: i32, %arg1: memref<16xi32, #tpu.memory_space<smem>>) -> (i32, i32) {
    %c0_i32 = arith.constant 0 : i32
    %c0_i32_0 = arith.constant 0 : i32
    %c0_i32_1 = arith.constant 0 : i32
    return %c0_i32, %c0_i32_0 : i32, i32
  }
  func.func @transform_6(%arg0: i32, %arg1: memref<16xi32, #tpu.memory_space<smem>>) -> (i32, i32) {
    %c0_i32 = arith.constant 0 : i32
    %c0_i32_0 = arith.constant 0 : i32
    %c0_i32_1 = arith.constant 0 : i32
    return %c0_i32, %c0_i32_0 : i32, i32
  }
}

</mosaic_0001>

<llo_original>
// kernel: textrcnn_forward.1
$region0: #{textrcnn_forward.1}
  #allocation0 [shape = 'u32[]', space=smem, size = 0x4, offset = 0x4, fixed_abs, tag = 'smem constant byte address 0x4 - core index']
  #allocation1 [shape = 'u32[144,128]{1,0:T(1,128)}', space=vmem, size = 0x12000, scoped, tag = 'internal scratch']
  #allocation2 [shape = 'f32[16,64]{1,0:T(8,128)}', space=vmem, size = 0x2000, scoped, tag = 'scratch operand']
  #allocation3 [shape = 's32[1]{0}', space=sflag, size = 0x4, scoped, tag = 'scoped memory for textrcnn_forward.1']
  #allocation4 [shape = 'u8[512]{0}', space=smem, size = 0x200, scoped, tag = 'prefetched SMEM operand 0']
  %s0 = inlined_call_operand.vmem [shape: s32[16], index: 0, kind: input, shape index: {}]
  %s1 = inlined_call_operand.vmem [shape: f32[56,32], index: 1, kind: input, shape index: {}]
  %s2 = inlined_call_operand.vmem [shape: f32[64,256], index: 2, kind: input, shape index: {}]
  %s3 = inlined_call_operand.hbm [shape: f32[64,256], index: 3, kind: input, shape index: {}]
  %s4 = inlined_call_operand.vmem [shape: f32[1,256], index: 4, kind: input, shape index: {}]
  %s5 = inlined_call_operand.vmem [shape: f32[96,4], index: 5, kind: input, shape index: {}]
  %s6 = inlined_call_operand.vmem [shape: f32[1,4], index: 6, kind: input, shape index: {}]
  %s7 = inlined_call_operand.hbm [shape: f32[2,4], index: 7, kind: output, shape index: {}]
  %s8 = sld [smem:[#allocation0]]
  $region38: #{textrcnn_forward.1} parent=0
    _
  %s10 = ssub.s32 1, %s8
  %s11 = scalar_select 0, %s10, %s8
  %s12 = sshll.u32 %s0, 4
  %s13 = int_to_ptr.vmem [resolvable:$true] %s12
  %15 = dma.vmem_to_smem %s13, 16, [#allocation4], [#allocation3]
  %16 = dma.done [#allocation3], 16
  %17 = sfence
  $region1: #{textrcnn_forward.1} parent=0
    #allocation5 [shape = 'u8[65536]{0}', space=vmem, size = 0x10000, scoped, tag = 'input window, operand 3, single buffered']
    #allocation6 [shape = 's32[1]{0}', space=sflag, size = 0x4, scoped, tag = 'scoped memory for textrcnn_forward.1']
    #allocation7 [shape = 's32[1]{0}', space=sflag, size = 0x4, scoped, tag = 'scoped memory for textrcnn_forward.1']
    #allocation8 [shape = 'u8[1024]{0}', space=vmem, size = 0x400, scoped, tag = 'output window, operand 0, single buffered']
    %18 = vsyncpa [#allocation6], 0
    %19 = vsyncpa [#allocation7], 0
    // Predicated region
    $region2: #{textrcnn_forward.1} parent=1 // pred_check
      _
    $region3: #{textrcnn_forward.1} parent=1 // pred_check_branch
      %21 = sbr.rel (0) target = $region5
    $region4: #{textrcnn_forward.1} parent=1 // pred_region
      _
    $region5: #{textrcnn_forward.1} parent=1 // pred_fallthru
      _
    // Predicated region
    $region6: #{textrcnn_forward.1} parent=1 // pred_check
      _
    $region7: #{textrcnn_forward.1} parent=1 // pred_check_branch
      %23 = sbr.rel (0) target = $region9
    $region8: #{textrcnn_forward.1} parent=1 // pred_region
      _
    $region9: #{textrcnn_forward.1} parent=1 // pred_fallthru
      _
    // Predicated region
    $region10: #{textrcnn_forward.1} parent=1 // pred_check
      _
    $region11: #{textrcnn_forward.1} parent=1 // pred_check_branch
      %25 = sbr.rel (0) target = $region13
    $region12: #{textrcnn_forward.1} parent=1 // pred_region
      %s27 = ssub.s32 2048, 2048
      %28 = vsyncadd [#allocation6], %s27
      %s29 = sshll.u32 [#allocation5], 4
      %s30 = int_to_ptr.vmem [resolvable:$true] %s29
      %35 = dma.hbm_to_vmem [thread:$0]  %s3, 2048, %s30, [#allocation6], 256, 256, 16
    $region13: #{textrcnn_forward.1} parent=1 // pred_fallthru
      _
    // Predicated region
    $region14: #{textrcnn_forward.1} parent=1 // pred_check
      _
    $region15: #{textrcnn_forward.1} parent=1 // pred_check_branch
      %37 = sbr.rel (0) target = $region17
    $region16: #{textrcnn_forward.1} parent=1 // pred_region
      _
    $region17: #{textrcnn_forward.1} parent=1 // pred_fallthru
      _
    // Predicated region
    $region18: #{textrcnn_forward.1} parent=1 // pred_check
      _
    $region19: #{textrcnn_forward.1} parent=1 // pred_check_branch
      %39 = sbr.rel (0) target = $region21
    $region20: #{textrcnn_forward.1} parent=1 // pred_region
      _
    $region21: #{textrcnn_forward.1} parent=1 // pred_fallthru
      _
    // Predicated region
    $region22: #{textrcnn_forward.1} parent=1 // pred_check
      _
    $region23: #{textrcnn_forward.1} parent=1 // pred_check_branch
      %41 = sbr.rel (0) target = $region25
    $region24: #{textrcnn_forward.1} parent=1 // pred_region
      _
    $region25: #{textrcnn_forward.1} parent=1 // pred_fallthru
      _
    // Predicated region
    $region26: #{textrcnn_forward.1} parent=1 // pred_check
      _
    $region27: #{textrcnn_forward.1} parent=1 // pred_check_branch
      %43 = sbr.rel (0) target = $region29
    $region28: #{textrcnn_forward.1} parent=1 // pred_region
      %44 = dma.done [#allocation6], 2048
    $region29: #{textrcnn_forward.1} parent=1 // pred_fallthru
      _
    %s45 = sld [smem:[#allocation4]]
    %s46 = scalar_lea.vmem %s1, %s45
    %v47 = vld [vmem:[%s46] sm:$0x1]
    %vm48 = vcmask 253952
    %49 = vst.msk [vmem:[#allocation2] sm:$0x1] %vm48, %v47
    %51 = vrot.lane.b32.xlu0 %v47, 32
    %v52 = vpop.permute.xlu0 %51
    %vm54 = vcmask 516352
    %55 = vst.msk [vmem:[#allocation2 + $0xe] sm:$0x1] %vm54, %v52
    %s56 = sld [smem:[#allocation4 + $0x1]]
    %s57 = scalar_lea.vmem %s1, %s56
    %v58 = vld [vmem:[%s57] sm:$0x1]
    %59 = vst.msk [vmem:[#allocation2 + $0x1] sm:$0x1] %vm48, %v58
    %61 = vrot.lane.b32.xlu0 %v58, 32
    %v62 = vpop.permute.xlu0 %61
    %64 = vst.msk [vmem:[#allocation2 + $0xf] sm:$0x1] %vm54, %v62
    %s65 = sld [smem:[#allocation4 + $0x2]]
    %s66 = scalar_lea.vmem %s1, %s65
    %v67 = vld [vmem:[%s66] sm:$0x1]
    %68 = vst.msk [vmem:[#allocation2 + $0x2] sm:$0x1] %vm48, %v67
    %70 = vrot.lane.b32.xlu0 %v67, 32
    %v71 = vpop.permute.xlu0 %70
    %73 = vst.msk [vmem:[#allocation2 + $0xc] sm:$0x1] %vm54, %v71
    %s74 = sld [smem:[#allocation4 + $0x3]]
    %s75 = scalar_lea.vmem %s1, %s74
    %v76 = vld [vmem:[%s75] sm:$0x1]
    %77 = vst.msk [vmem:[#allocation2 + $0x3] sm:$0x1] %vm48, %v76
    %79 = vrot.lane.b32.xlu0 %v76, 32
    %v80 = vpop.permute.xlu0 %79
    %82 = vst.msk [vmem:[#allocation2 + $0xd] sm:$0x1] %vm54, %v80
    %s83 = sld [smem:[#allocation4 + $0x4]]
    %s84 = scalar_lea.vmem %s1, %s83
    %v85 = vld [vmem:[%s84] sm:$0x1]
    %86 = vst.msk [vmem:[#allocation2 + $0x4] sm:$0x1] %vm48, %v85
    %88 = vrot.lane.b32.xlu0 %v85, 32
    %v89 = vpop.permute.xlu0 %88
    %91 = vst.msk [vmem:[#allocation2 + $0xa] sm:$0x1] %vm54, %v89
    %s92 = sld [smem:[#allocation4 + $0x5]]
    %s93 = scalar_lea.vmem %s1, %s92
    %v94 = vld [vmem:[%s93] sm:$0x1]
    %95 = vst.msk [vmem:[#allocation2 + $0x5] sm:$0x1] %vm48, %v94
    %97 = vrot.lane.b32.xlu0 %v94, 32
    %v98 = vpop.permute.xlu0 %97
    %100 = vst.msk [vmem:[#allocation2 + $0xb] sm:$0x1] %vm54, %v98
    %s101 = sld [smem:[#allocation4 + $0x6]]
    %s102 = scalar_lea.vmem %s1, %s101
    %v103 = vld [vmem:[%s102] sm:$0x1]
    %104 = vst.msk [vmem:[#allocation2 + $0x6] sm:$0x1] %vm48, %v103
    %106 = vrot.lane.b32.xlu0 %v103, 32
    %v107 = vpop.permute.xlu0 %106
    %109 = vst.msk [vmem:[#allocation2 + $0x8] sm:$0x1] %vm54, %v107
    %s110 = sld [smem:[#allocation4 + $0x7]]
    %s111 = scalar_lea.vmem %s1, %s110
    %v112 = vld [vmem:[%s111] sm:$0x1]
    %113 = vst.msk [vmem:[#allocation2 + $0x7] sm:$0x1] %vm48, %v112
    %115 = vrot.lane.b32.xlu0 %v112, 32
    %v116 = vpop.permute.xlu0 %115
    %118 = vst.msk [vmem:[#allocation2 + $0x9] sm:$0x1] %vm54, %v116
    %s119 = sld [smem:[#allocation4 + $0x8]]
    %s120 = scalar_lea.vmem %s1, %s119
    %v121 = vld [vmem:[%s120] sm:$0x1]
    %122 = vst.msk [vmem:[#allocation2 + $0x8] sm:$0x1] %vm48, %v121
    %124 = vrot.lane.b32.xlu0 %v121, 32
    %v125 = vpop.permute.xlu0 %124
    %127 = vst.msk [vmem:[#allocation2 + $0x6] sm:$0x1] %vm54, %v125
    %s128 = sld [smem:[#allocation4 + $0x9]]
    %s129 = scalar_lea.vmem %s1, %s128
    %v130 = vld [vmem:[%s129] sm:$0x1]
    %131 = vst.msk [vmem:[#allocation2 + $0x9] sm:$0x1] %vm48, %v130
    %133 = vrot.lane.b32.xlu0 %v130, 32
    %v134 = vpop.permute.xlu0 %133
    %136 = vst.msk [vmem:[#allocation2 + $0x7] sm:$0x1] %vm54, %v134
    %s137 = sld [smem:[#allocation4 + $0xa]]
    %s138 = scalar_lea.vmem %s1, %s137
    %v139 = vld [vmem:[%s138] sm:$0x1]
    %140 = vst.msk [vmem:[#allocation2 + $0xa] sm:$0x1] %vm48, %v139
    %142 = vrot.lane.b32.xlu0 %v139, 32
    %v143 = vpop.permute.xlu0 %142
    %145 = vst.msk [vmem:[#allocation2 + $0x4] sm:$0x1] %vm54, %v143
    %s146 = sld [smem:[#allocation4 + $0xb]]
    %s147 = scalar_lea.vmem %s1, %s146
    %v148 = vld [vmem:[%s147] sm:$0x1]
    %149 = vst.msk [vmem:[#allocation2 + $0xb] sm:$0x1] %vm48, %v148
    %151 = vrot.lane.b32.xlu0 %v148, 32
    %v152 = vpop.permute.xlu0 %151
    %154 = vst.msk [vmem:[#allocation2 + $0x5] sm:$0x1] %vm54, %v152
    %s155 = sld [smem:[#allocation4 + $0xc]]
    %s156 = scalar_lea.vmem %s1, %s155
    %v157 = vld [vmem:[%s156] sm:$0x1]
    %158 = vst.msk [vmem:[#allocation2 + $0xc] sm:$0x1] %vm48, %v157
    %160 = vrot.lane.b32.xlu0 %v157, 32
    %v161 = vpop.permute.xlu0 %160
    %163 = vst.msk [vmem:[#allocation2 + $0x2] sm:$0x1] %vm54, %v161
    %s164 = sld [smem:[#allocation4 + $0xd]]
    %s165 = scalar_lea.vmem %s1, %s164
    %v166 = vld [vmem:[%s165] sm:$0x1]
    %167 = vst.msk [vmem:[#allocation2 + $0xd] sm:$0x1] %vm48, %v166
    %169 = vrot.lane.b32.xlu0 %v166, 32
    %v170 = vpop.permute.xlu0 %169
    %172 = vst.msk [vmem:[#allocation2 + $0x3] sm:$0x1] %vm54, %v170
    %s173 = sld [smem:[#allocation4 + $0xe]]
    %s174 = scalar_lea.vmem %s1, %s173
    %v175 = vld [vmem:[%s174] sm:$0x1]
    %176 = vst.msk [vmem:[#allocation2 + $0xe] sm:$0x1] %vm48, %v175
    %178 = vrot.lane.b32.xlu0 %v175, 32
    %v179 = vpop.permute.xlu0 %178
    %181 = vst.msk [vmem:[#allocation2] sm:$0x1] %vm54, %v179
    %s182 = sld [smem:[#allocation4 + $0xf]]
    %s183 = scalar_lea.vmem %s1, %s182
    %v184 = vld [vmem:[%s183] sm:$0x1]
    %185 = vst.msk [vmem:[#allocation2 + $0xf] sm:$0x1] %vm48, %v184
    %187 = vrot.lane.b32.xlu0 %v184, 32
    %v188 = vpop.permute.xlu0 %187
    %190 = vst.msk [vmem:[#allocation2 + $0x1] sm:$0x1] %vm54, %v188
    %v191 = vld [vmem:[#allocation2] sm:$0xff]
    %v192 = vld [vmem:[#allocation2 + $0x8] sm:$0xff]
    %v193 = vld [vmem:[%s2] sm:$0xff]
    %v194 = vld [vmem:[%s2 + $0x8] sm:$0xff]
    %v195 = vld [vmem:[%s2 + $0x10] sm:$0xff]
    %v196 = vld [vmem:[%s2 + $0x18] sm:$0xff]
    %v197 = vld [vmem:[%s2 + $0x20] sm:$0xff]
    %v198 = vld [vmem:[%s2 + $0x28] sm:$0xff]
    %v199 = vld [vmem:[%s2 + $0x30] sm:$0xff]
    %v200 = vld [vmem:[%s2 + $0x38] sm:$0xff]
    %v201 = vld [vmem:[%s2 + $0x40] sm:$0xff]
    %v202 = vld [vmem:[%s2 + $0x48] sm:$0xff]
    %v203 = vld [vmem:[%s2 + $0x50] sm:$0xff]
    %v204 = vld [vmem:[%s2 + $0x58] sm:$0xff]
    %v205 = vld [vmem:[%s2 + $0x60] sm:$0xff]
    %v206 = vld [vmem:[%s2 + $0x68] sm:$0xff]
    %v207 = vld [vmem:[%s2 + $0x70] sm:$0xff]
    %v208 = vld [vmem:[%s2 + $0x78] sm:$0xff]
    %v209 = vld [vmem:[%s4] sm:$0x3]
    %v211 = vlaneseq
    %v212 = vshrl.u32 %v211, 7
    %v213 = vsub.s32 0, %v212
    %v214 = vrot.slane %v209, %v213
    %v215 = vlaneseq
    %v216 = vshrl.u32 %v215, 7
    %v217 = vsub.s32 1, %v216
    %v218 = vrot.slane %v209, %v217
    %vm221 = vcmask 523264
    %v223 = vsel %vm221, %v191, 0
    %v226 = vsel %vm221, %v192, 0
    %228 = vmatprep.subr.mxu0 %v194
    %229 = vmatpush1.msra.mxu0 %v193
    %230 = vmatprep.subr.mxu0 %v196
    %231 = vmatpush1.msra.mxu0 %v195
    %232 = vmatprep.subr.mxu0 %v198
    %233 = vmatpush1.msra.mxu0 %v197
    %234 = vmatprep.subr.mxu0 %v200
    %235 = vmatpush1.msra.mxu0 %v199
    %236 = vmatprep.subr.mxu0 %v202
    %237 = vmatpush1.msra.mxu0 %v201
    %238 = vmatprep.subr.mxu0 %v204
    %239 = vmatpush1.msra.mxu0 %v203
    %240 = vmatprep.subr.mxu0 %v206
    %241 = vmatpush1.msra.mxu0 %v205
    %242 = vmatprep.subr.mxu0 %v208
    %243 = vmatpush1.msra.mxu0 %v207
    %244 = vmatprep.subr.mxu0 0.0
    %245 = vmatpush1.msra.mxu0 0.0
    %246 = vmatprep.subr.mxu0 0.0
    %247 = vmatpush1.msra.mxu0 0.0
    %248 = vmatprep.subr.mxu0 0.0
    %249 = vmatpush1.msra.mxu0 0.0
    %250 = vmatprep.subr.mxu0 0.0
    %251 = vmatpush1.msra.mxu0 0.0
    %252 = vmatprep.subr.mxu0 0.0
    %253 = vmatpush1.msra.mxu0 0.0
    %254 = vmatprep.subr.mxu0 0.0
    %255 = vmatpush1.msra.mxu0 0.0
    %256 = vmatprep.subr.mxu0 0.0
    %257 = vmatpush1.msra.mxu0 0.0
    %258 = vmatprep.subr.mxu0 0.0
    %259 = vmatpush1.msra.mxu0 0.0
    %260 = vmatprep.subr.mxu0 0.0
    %261 = vmatpush1.msra.mxu0 0.0
    %262 = vmatprep.subr.mxu0 0.0
    %263 = vmatpush1.msra.mxu0 0.0
    %264 = vmatprep.subr.mxu0 0.0
    %265 = vmatpush1.msra.mxu0 0.0
    %266 = vmatprep.subr.mxu0 0.0
    %267 = vmatpush1.msra.mxu0 0.0
    %268 = vmatprep.subr.mxu0 0.0
    %269 = vmatpush1.msra.mxu0 0.0
    %270 = vmatprep.subr.mxu0 0.0
    %271 = vmatpush1.msra.mxu0 0.0
    %272 = vmatprep.subr.mxu0 0.0
    %273 = vmatpush1.msra.mxu0 0.0
    %274 = vmatprep.subr.mxu0 0.0
    %275 = vmatpush1.msra.mxu0 0.0
    %276 = vmatprep.subr.mxu0 0.0
    %277 = vmatpush1.msra.mxu0 0.0
    %278 = vmatprep.subr.mxu0 0.0
    %279 = vmatpush1.msra.mxu0 0.0
    %280 = vmatprep.subr.mxu0 0.0
    %281 = vmatpush1.msra.mxu0 0.0
    %282 = vmatprep.subr.mxu0 0.0
    %283 = vmatpush1.msra.mxu0 0.0
    %284 = vmatprep.subr.mxu0 0.0
    %285 = vmatpush1.msra.mxu0 0.0
    %286 = vmatprep.subr.mxu0 0.0
    %287 = vmatpush1.msra.mxu0 0.0
    %288 = vmatprep.subr.mxu0 0.0
    %289 = vmatpush1.msra.mxu0 0.0
    %290 = vmatprep.subr.mxu0 0.0
    %291 = vmatpush1.msra.mxu0 0.0
    %292 = vmatprep.mubr.f32.mxu0 0.0
    %293 = vmatmul.mubr.f32.gmra.mrb[0].mxu0 %v223
    %v294 = vpop.f32.mrb[0].mxu0
    %v295 = vadd.f32 %v214, %v294
    %v296 = vpop.f32.mrb[0].mxu0
    %v297 = vadd.f32 %v218, %v296
    %298 = vmatprep.mubr.f32.mxu0 0.0
    %299 = vmatmul.mubr.f32.gmra.mrb[0].mxu0 %v226
    %v300 = vpop.f32.mrb[0].mxu0
    %v301 = vadd.f32 %v214, %v300
    %v302 = vpop.f32.mrb[0].mxu0
    %v303 = vadd.f32 %v218, %v302
    %304 = vdwg.mxu0
    %v305 = vrot.slane %v191, 2
    %v307 = vmax.f32 %v191, %v305
    %v308 = vrot.slane %v191, 4
    %v310 = vmax.f32 %v307, %v308
    %v311 = vrot.slane %v191, 6
    %v313 = vmax.f32 %v310, %v311
    %v314 = vmax.f32 %v313, %v192
    %v315 = vrot.slane %v192, 2
    %v317 = vmax.f32 %v314, %v315
    %v318 = vrot.slane %v192, 4
    %v320 = vmax.f32 %v317, %v318
    %v321 = vrot.slane %v192, 6
    %v323 = vmax.f32 %v320, %v321
    %v324 = vmax.f32 %v323, 0.0
    %v325 = vld [vmem:[#allocation5] sm:$0xff]
    %v326 = vld [vmem:[#allocation5 + $0x8] sm:$0xff]
    %v327 = vld [vmem:[#allocation5 + $0x10] sm:$0xff]
    %v328 = vld [vmem:[#allocation5 + $0x18] sm:$0xff]
    %v329 = vld [vmem:[#allocation5 + $0x20] sm:$0xff]
    %v330 = vld [vmem:[#allocation5 + $0x28] sm:$0xff]
    %v331 = vld [vmem:[#allocation5 + $0x30] sm:$0xff]
    %v332 = vld [vmem:[#allocation5 + $0x38] sm:$0xff]
    %v333 = vld [vmem:[#allocation5 + $0x40] sm:$0xff]
    %v334 = vld [vmem:[#allocation5 + $0x48] sm:$0xff]
    %v335 = vld [vmem:[#allocation5 + $0x50] sm:$0xff]
    %v336 = vld [vmem:[#allocation5 + $0x58] sm:$0xff]
    %v337 = vld [vmem:[#allocation5 + $0x60] sm:$0xff]
    %v338 = vld [vmem:[#allocation5 + $0x68] sm:$0xff]
    %v339 = vld [vmem:[#allocation5 + $0x70] sm:$0xff]
    %v340 = vld [vmem:[#allocation5 + $0x78] sm:$0xff]
    %v342 = vsel %vm221, 0.0, 0
    %344 = vmatprep.subr.mxu0 %v326
    %345 = vmatpush1.msra.mxu0 %v325
    %346 = vmatprep.subr.mxu0 %v328
    %347 = vmatpush1.msra.mxu0 %v327
    %348 = vmatprep.subr.mxu0 %v330
    %349 = vmatpush1.msra.mxu0 %v329
    %350 = vmatprep.subr.mxu0 %v332
    %351 = vmatpush1.msra.mxu0 %v331
    %352 = vmatprep.subr.mxu0 %v334
    %353 = vmatpush1.msra.mxu0 %v333
    %354 = vmatprep.subr.mxu0 %v336
    %355 = vmatpush1.msra.mxu0 %v335
    %356 = vmatprep.subr.mxu0 %v338
    %357 = vmatpush1.msra.mxu0 %v337
    %358 = vmatprep.subr.mxu0 %v340
    %359 = vmatpush1.msra.mxu0 %v339
    %360 = vmatprep.subr.mxu0 0.0
    %361 = vmatpush1.msra.mxu0 0.0
    %362 = vmatprep.subr.mxu0 0.0
    %363 = vmatpush1.msra.mxu0 0.0
    %364 = vmatprep.subr.mxu0 0.0
    %365 = vmatpush1.msra.mxu0 0.0
    %366 = vmatprep.subr.mxu0 0.0
    %367 = vmatpush1.msra.mxu0 0.0
    %368 = vmatprep.subr.mxu0 0.0
    %369 = vmatpush1.msra.mxu0 0.0
    %370 = vmatprep.subr.mxu0 0.0
    %371 = vmatpush1.msra.mxu0 0.0
    %372 = vmatprep.subr.mxu0 0.0
    %373 = vmatpush1.msra.mxu0 0.0
    %374 = vmatprep.subr.mxu0 0.0
    %375 = vmatpush1.msra.mxu0 0.0
    %376 = vmatprep.subr.mxu0 0.0
    %377 = vmatpush1.msra.mxu0 0.0
    %378 = vmatprep.subr.mxu0 0.0
    %379 = vmatpush1.msra.mxu0 0.0
    %380 = vmatprep.subr.mxu0 0.0
    %381 = vmatpush1.msra.mxu0 0.0
    %382 = vmatprep.subr.mxu0 0.0
    %383 = vmatpush1.msra.mxu0 0.0
    %384 = vmatprep.subr.mxu0 0.0
    %385 = vmatpush1.msra.mxu0 0.0
    %386 = vmatprep.subr.mxu0 0.0
    %387 = vmatpush1.msra.mxu0 0.0
    %388 = vmatprep.subr.mxu0 0.0
    %389 = vmatpush1.msra.mxu0 0.0
    %390 = vmatprep.subr.mxu0 0.0
    %391 = vmatpush1.msra.mxu0 0.0
    %392 = vmatprep.subr.mxu0 0.0
    %393 = vmatpush1.msra.mxu0 0.0
    %394 = vmatprep.subr.mxu0 0.0
    %395 = vmatpush1.msra.mxu0 0.0
    %396 = vmatprep.subr.mxu0 0.0
    %397 = vmatpush1.msra.mxu0 0.0
    %398 = vmatprep.subr.mxu0 0.0
    %399 = vmatpush1.msra.mxu0 0.0
    %400 = vmatprep.subr.mxu0 0.0
    %401 = vmatpush1.msra.mxu0 0.0
    %402 = vmatprep.subr.mxu0 0.0
    %403 = vmatpush1.msra.mxu0 0.0
    %404 = vmatprep.subr.mxu0 0.0
    %405 = vmatpush1.msra.mxu0 0.0
    %406 = vmatprep.subr.mxu0 0.0
    %407 = vmatpush1.msra.mxu0 0.0
    %408 = vmatprep.mubr.f32.mxu0 0.0
    %409 = vmatmul.mubr.f32.gmra.mrb[0].mxu0 %v342
    %v410 = vpop.f32.mrb[0].mxu0
    %v411 = vadd.f32 0.0, %v410
    %v412 = vpop.f32.mrb[0].mxu0
    %v413 = vadd.f32 0.0, %v412
    %414 = vdwg.mxu0
    %v415 = vadd.f32 %v295, %v411
    %v416 = vadd.f32 %v297, %v413
    %v417 = vxor.u32 %v415, 2147483648
    %v418 = vxor.u32 %v416, 2147483648
    %v419 = vmul.f32 %v417, 1.442695
    %v420 = vpow.pop %v419
    %v421 = vmul.f32 %v418, 1.442695
    %v422 = vpow.pop %v421
    %v423 = vadd.f32 %v420, 1.0
    %v424 = vadd.f32 %v422, 1.0
    %v425 = vrcp.pop %v423
    %v426 = vmul.f32 1.0, %v425
    %v427 = vrcp.pop %v424
    %v428 = vmul.f32 1.0, %v427
    %v429 = vtanh.pop %v416
    %v430 = vmul.f32 %v426, 0.0
    %432 = vrot.lane.b32.xlu0 %v429, 64
    %v433 = vpop.permute.xlu0 %432
    %v435 = vmul.f32 %v426, %v433
    %437 = vrot.lane.b32.xlu0 %v435, 64
    %v438 = vpop.permute.xlu0 %437
    %v440 = vadd.f32 %v430, %v438
    %v441 = vtanh.pop %v440
    %443 = vrot.lane.b32.xlu0 %v441, 64
    %v444 = vpop.permute.xlu0 %443
    %v446 = vmul.f32 %v428, %v444
    %v447 = vmax.f32 %v446, 0.0
    %v449 = vsel %vm221, %v446, 0
    %451 = vmatprep.subr.mxu0 %v326
    %452 = vmatpush1.msra.mxu0 %v325
    %453 = vmatprep.subr.mxu0 %v328
    %454 = vmatpush1.msra.mxu0 %v327
    %455 = vmatprep.subr.mxu0 %v330
    %456 = vmatpush1.msra.mxu0 %v329
    %457 = vmatprep.subr.mxu0 %v332
    %458 = vmatpush1.msra.mxu0 %v331
    %459 = vmatprep.subr.mxu0 %v334
    %460 = vmatpush1.msra.mxu0 %v333
    %461 = vmatprep.subr.mxu0 %v336
    %462 = vmatpush1.msra.mxu0 %v335
    %463 = vmatprep.subr.mxu0 %v338
    %464 = vmatpush1.msra.mxu0 %v337
    %465 = vmatprep.subr.mxu0 %v340
    %466 = vmatpush1.msra.mxu0 %v339
    %467 = vmatprep.subr.mxu0 0.0
    %468 = vmatpush1.msra.mxu0 0.0
    %469 = vmatprep.subr.mxu0 0.0
    %470 = vmatpush1.msra.mxu0 0.0
    %471 = vmatprep.subr.mxu0 0.0
    %472 = vmatpush1.msra.mxu0 0.0
    %473 = vmatprep.subr.mxu0 0.0
    %474 = vmatpush1.msra.mxu0 0.0
    %475 = vmatprep.subr.mxu0 0.0
    %476 = vmatpush1.msra.mxu0 0.0
    %477 = vmatprep.subr.mxu0 0.0
    %478 = vmatpush1.msra.mxu0 0.0
    %479 = vmatprep.subr.mxu0 0.0
    %480 = vmatpush1.msra.mxu0 0.0
    %481 = vmatprep.subr.mxu0 0.0
    %482 = vmatpush1.msra.mxu0 0.0
    %483 = vmatprep.subr.mxu0 0.0
    %484 = vmatpush1.msra.mxu0 0.0
    %485 = vmatprep.subr.mxu0 0.0
    %486 = vmatpush1.msra.mxu0 0.0
    %487 = vmatprep.subr.mxu0 0.0
    %488 = vmatpush1.msra.mxu0 0.0
    %489 = vmatprep.subr.mxu0 0.0
    %490 = vmatpush1.msra.mxu0 0.0
    %491 = vmatprep.subr.mxu0 0.0
    %492 = vmatpush1.msra.mxu0 0.0
    %493 = vmatprep.subr.mxu0 0.0
    %494 = vmatpush1.msra.mxu0 0.0
    %495 = vmatprep.subr.mxu0 0.0
    %496 = vmatpush1.msra.mxu0 0.0
    %497 = vmatprep.subr.mxu0 0.0
    %498 = vmatpush1.msra.mxu0 0.0
    %499 = vmatprep.subr.mxu0 0.0
    %500 = vmatpush1.msra.mxu0 0.0
    %501 = vmatprep.subr.mxu0 0.0
    %502 = vmatpush1.msra.mxu0 0.0
    %503 = vmatprep.subr.mxu0 0.0
    %504 = vmatpush1.msra.mxu0 0.0
    %505 = vmatprep.subr.mxu0 0.0
    %506 = vmatpush1.msra.mxu0 0.0
    %507 = vmatprep.subr.mxu0 0.0
    %508 = vmatpush1.msra.mxu0 0.0
    %509 = vmatprep.subr.mxu0 0.0
    %510 = vmatpush1.msra.mxu0 0.0
    %511 = vmatprep.subr.mxu0 0.0
    %512 = vmatpush1.msra.mxu0 0.0
    %513 = vmatprep.subr.mxu0 0.0
    %514 = vmatpush1.msra.mxu0 0.0
    %515 = vmatprep.mubr.f32.mxu0 0.0
    %516 = vmatmul.mubr.f32.gmra.mrb[0].mxu0 %v449
    %v517 = vpop.f32.mrb[0].mxu0
    %v518 = vadd.f32 0.0, %v517
    %v519 = vpop.f32.mrb[0].mxu0
    %v520 = vadd.f32 0.0, %v519
    %521 = vdwg.mxu0
    %v524 = vrot.slane %v518, 6
    %v525 = vrot.slane %v520, 6
    %v528 = vadd.f32 %v295, %v524
    %v529 = vadd.f32 %v297, %v525
    %v530 = vxor.u32 %v528, 2147483648
    %v531 = vxor.u32 %v529, 2147483648
    %v532 = vmul.f32 %v530, 1.442695
    %v533 = vpow.pop %v532
    %v534 = vmul.f32 %v531, 1.442695
    %v535 = vpow.pop %v534
    %v536 = vadd.f32 %v533, 1.0
    %v537 = vadd.f32 %v535, 1.0
    %v538 = vrcp.pop %v536
    %v539 = vmul.f32 1.0, %v538
    %v540 = vrcp.pop %v537
    %v541 = vmul.f32 1.0, %v540
    %v542 = vtanh.pop %v529
    %v544 = vrot.slane %v440, 6
    %v546 = vmul.f32 %v539, %v544
    %548 = vrot.lane.b32.xlu0 %v542, 64
    %v549 = vpop.permute.xlu0 %548
    %v551 = vmul.f32 %v539, %v549
    %553 = vrot.lane.b32.xlu0 %v551, 64
    %v554 = vpop.permute.xlu0 %553
    %v556 = vadd.f32 %v546, %v554
    %v557 = vtanh.pop %v556
    %559 = vrot.lane.b32.xlu0 %v557, 64
    %v560 = vpop.permute.xlu0 %559
    %v562 = vmul.f32 %v541, %v560
    %v564 = vrot.slane %v562, 2
    %v566 = vmax.f32 %v447, %v564
    %v567 = vsel %vm221, %v564, 0
    %569 = vmatprep.subr.mxu0 %v326
    %570 = vmatpush1.msra.mxu0 %v325
    %571 = vmatprep.subr.mxu0 %v328
    %572 = vmatpush1.msra.mxu0 %v327
    %573 = vmatprep.subr.mxu0 %v330
    %574 = vmatpush1.msra.mxu0 %v329
    %575 = vmatprep.subr.mxu0 %v332
    %576 = vmatpush1.msra.mxu0 %v331
    %577 = vmatprep.subr.mxu0 %v334
    %578 = vmatpush1.msra.mxu0 %v333
    %579 = vmatprep.subr.mxu0 %v336
    %580 = vmatpush1.msra.mxu0 %v335
    %581 = vmatprep.subr.mxu0 %v338
    %582 = vmatpush1.msra.mxu0 %v337
    %583 = vmatprep.subr.mxu0 %v340
    %584 = vmatpush1.msra.mxu0 %v339
    %585 = vmatprep.subr.mxu0 0.0
    %586 = vmatpush1.msra.mxu0 0.0
    %587 = vmatprep.subr.mxu0 0.0
    %588 = vmatpush1.msra.mxu0 0.0
    %589 = vmatprep.subr.mxu0 0.0
    %590 = vmatpush1.msra.mxu0 0.0
    %591 = vmatprep.subr.mxu0 0.0
    %592 = vmatpush1.msra.mxu0 0.0
    %593 = vmatprep.subr.mxu0 0.0
    %594 = vmatpush1.msra.mxu0 0.0
    %595 = vmatprep.subr.mxu0 0.0
    %596 = vmatpush1.msra.mxu0 0.0
    %597 = vmatprep.subr.mxu0 0.0
    %598 = vmatpush1.msra.mxu0 0.0
    %599 = vmatprep.subr.mxu0 0.0
    %600 = vmatpush1.msra.mxu0 0.0
    %601 = vmatprep.subr.mxu0 0.0
    %602 = vmatpush1.msra.mxu0 0.0
    %603 = vmatprep.subr.mxu0 0.0
    %604 = vmatpush1.msra.mxu0 0.0
    %605 = vmatprep.subr.mxu0 0.0
    %606 = vmatpush1.msra.mxu0 0.0
    %607 = vmatprep.subr.mxu0 0.0
    %608 = vmatpush1.msra.mxu0 0.0
    %609 = vmatprep.subr.mxu0 0.0
    %610 = vmatpush1.msra.mxu0 0.0
    %611 = vmatprep.subr.mxu0 0.0
    %612 = vmatpush1.msra.mxu0 0.0
    %613 = vmatprep.subr.mxu0 0.0
    %614 = vmatpush1.msra.mxu0 0.0
    %615 = vmatprep.subr.mxu0 0.0
    %616 = vmatpush1.msra.mxu0 0.0
    %617 = vmatprep.subr.mxu0 0.0
    %618 = vmatpush1.msra.mxu0 0.0
    %619 = vmatprep.subr.mxu0 0.0
    %620 = vmatpush1.msra.mxu0 0.0
    %621 = vmatprep.subr.mxu0 0.0
    %622 = vmatpush1.msra.mxu0 0.0
    %623 = vmatprep.subr.mxu0 0.0
    %624 = vmatpush1.msra.mxu0 0.0
    %625 = vmatprep.subr.mxu0 0.0
    %626 = vmatpush1.msra.mxu0 0.0
    %627 = vmatprep.subr.mxu0 0.0
    %628 = vmatpush1.msra.mxu0 0.0
    %629 = vmatprep.subr.mxu0 0.0
    %630 = vmatpush1.msra.mxu0 0.0
    %631 = vmatprep.subr.mxu0 0.0
    %632 = vmatpush1.msra.mxu0 0.0
    %633 = vmatprep.mubr.f32.mxu0 0.0
    %634 = vmatmul.mubr.f32.gmra.mrb[0].mxu0 %v567
    %v635 = vpop.f32.mrb[0].mxu0
    %v636 = vadd.f32 0.0, %v635
    %v637 = vpop.f32.mrb[0].mxu0
    %v638 = vadd.f32 0.0, %v637
    %639 = vdwg.mxu0
    %v642 = vrot.slane %v636, 4
    %v643 = vrot.slane %v638, 4
    %v646 = vadd.f32 %v295, %v642
    %v647 = vadd.f32 %v297, %v643
    %v648 = vxor.u32 %v646, 2147483648
    %v649 = vxor.u32 %v647, 2147483648
    %v650 = vmul.f32 %v648, 1.442695
    %v651 = vpow.pop %v650
    %v652 = vmul.f32 %v649, 1.442695
    %v653 = vpow.pop %v652
    %v654 = vadd.f32 %v651, 1.0
    %v655 = vadd.f32 %v653, 1.0
    %v656 = vrcp.pop %v654
    %v657 = vmul.f32 1.0, %v656
    %v658 = vrcp.pop %v655
    %v659 = vmul.f32 1.0, %v658
    %v660 = vtanh.pop %v647
    %v662 = vrot.slane %v556, 6
    %v664 = vmul.f32 %v657, %v662
    %666 = vrot.lane.b32.xlu0 %v660, 64
    %v667 = vpop.permute.xlu0 %666
    %v669 = vmul.f32 %v657, %v667
    %671 = vrot.lane.b32.xlu0 %v669, 64
    %v672 = vpop.permute.xlu0 %671
    %v674 = vadd.f32 %v664, %v672
    %v675 = vtanh.pop %v674
    %677 = vrot.lane.b32.xlu0 %v675, 64
    %v678 = vpop.permute.xlu0 %677
    %v680 = vmul.f32 %v659, %v678
    %v682 = vrot.slane %v680, 4
    %v684 = vmax.f32 %v566, %v682
    %v685 = vsel %vm221, %v682, 0
    %687 = vmatprep.subr.mxu0 %v326
    %688 = vmatpush1.msra.mxu0 %v325
    %689 = vmatprep.subr.mxu0 %v328
    %690 = vmatpush1.msra.mxu0 %v327
    %691 = vmatprep.subr.mxu0 %v330
    %692 = vmatpush1.msra.mxu0 %v329
    %693 = vmatprep.subr.mxu0 %v332
    %694 = vmatpush1.msra.mxu0 %v331
    %695 = vmatprep.subr.mxu0 %v334
    %696 = vmatpush1.msra.mxu0 %v333
    %697 = vmatprep.subr.mxu0 %v336
    %698 = vmatpush1.msra.mxu0 %v335
    %699 = vmatprep.subr.mxu0 %v338
    %700 = vmatpush1.msra.mxu0 %v337
    %701 = vmatprep.subr.mxu0 %v340
    %702 = vmatpush1.msra.mxu0 %v339
    %703 = vmatprep.subr.mxu0 0.0
    %704 = vmatpush1.msra.mxu0 0.0
    %705 = vmatprep.subr.mxu0 0.0
    %706 = vmatpush1.msra.mxu0 0.0
    %707 = vmatprep.subr.mxu0 0.0
    %708 = vmatpush1.msra.mxu0 0.0
    %709 = vmatprep.subr.mxu0 0.0
    %710 = vmatpush1.msra.mxu0 0.0
    %711 = vmatprep.subr.mxu0 0.0
    %712 = vmatpush1.msra.mxu0 0.0
    %713 = vmatprep.subr.mxu0 0.0
    %714 = vmatpush1.msra.mxu0 0.0
    %715 = vmatprep.subr.mxu0 0.0
    %716 = vmatpush1.msra.mxu0 0.0
    %717 = vmatprep.subr.mxu0 0.0
    %718 = vmatpush1.msra.mxu0 0.0
    %719 = vmatprep.subr.mxu0 0.0
    %720 = vmatpush1.msra.mxu0 0.0
    %721 = vmatprep.subr.mxu0 0.0
    %722 = vmatpush1.msra.mxu0 0.0
    %723 = vmatprep.subr.mxu0 0.0
    %724 = vmatpush1.msra.mxu0 0.0
    %725 = vmatprep.subr.mxu0 0.0
    %726 = vmatpush1.msra.mxu0 0.0
    %727 = vmatprep.subr.mxu0 0.0
    %728 = vmatpush1.msra.mxu0 0.0
    %729 = vmatprep.subr.mxu0 0.0
    %730 = vmatpush1.msra.mxu0 0.0
    %731 = vmatprep.subr.mxu0 0.0
    %732 = vmatpush1.msra.mxu0 0.0
    %733 = vmatprep.subr.mxu0 0.0
    %734 = vmatpush1.msra.mxu0 0.0
    %735 = vmatprep.subr.mxu0 0.0
    %736 = vmatpush1.msra.mxu0 0.0
    %737 = vmatprep.subr.mxu0 0.0
    %738 = vmatpush1.msra.mxu0 0.0
    %739 = vmatprep.subr.mxu0 0.0
    %740 = vmatpush1.msra.mxu0 0.0
    %741 = vmatprep.subr.mxu0 0.0
    %742 = vmatpush1.msra.mxu0 0.0
    %743 = vmatprep.subr.mxu0 0.0
    %744 = vmatpush1.msra.mxu0 0.0
    %745 = vmatprep.subr.mxu0 0.0
    %746 = vmatpush1.msra.mxu0 0.0
    %747 = vmatprep.subr.mxu0 0.0
    %748 = vmatpush1.msra.mxu0 0.0
    %749 = vmatprep.subr.mxu0 0.0
    %750 = vmatpush1.msra.mxu0 0.0
    %751 = vmatprep.mubr.f32.mxu0 0.0
    %752 = vmatmul.mubr.f32.gmra.mrb[0].mxu0 %v685
    %v753 = vpop.f32.mrb[0].mxu0
    %v754 = vadd.f32 0.0, %v753
    %v755 = vpop.f32.mrb[0].mxu0
    %v756 = vadd.f32 0.0, %v755
    %757 = vdwg.mxu0
    %v760 = vrot.slane %v754, 2
    %v761 = vrot.slane %v756, 2
    %v764 = vadd.f32 %v295, %v760
    %v765 = vadd.f32 %v297, %v761
    %v766 = vxor.u32 %v764, 2147483648
    %v767 = vxor.u32 %v765, 2147483648
    %v768 = vmul.f32 %v766, 1.442695
    %v769 = vpow.pop %v768
    %v770 = vmul.f32 %v767, 1.442695
    %v771 = vpow.pop %v770
    %v772 = vadd.f32 %v769, 1.0
    %v773 = vadd.f32 %v771, 1.0
    %v774 = vrcp.pop %v772
    %v775 = vmul.f32 1.0, %v774
    %v776 = vrcp.pop %v773
    %v777 = vmul.f32 1.0, %v776
    %v778 = vtanh.pop %v765
    %v780 = vrot.slane %v674, 6
    %v782 = vmul.f32 %v775, %v780
    %784 = vrot.lane.b32.xlu0 %v778, 64
    %v785 = vpop.permute.xlu0 %784
    %v787 = vmul.f32 %v775, %v785
    %789 = vrot.lane.b32.xlu0 %v787, 64
    %v790 = vpop.permute.xlu0 %789
    %v792 = vadd.f32 %v782, %v790
    %v793 = vtanh.pop %v792
    %795 = vrot.lane.b32.xlu0 %v793, 64
    %v796 = vpop.permute.xlu0 %795
    %v798 = vmul.f32 %v777, %v796
    %v800 = vrot.slane %v798, 6
    %v802 = vmax.f32 %v684, %v800
    %v803 = vsel %vm221, %v800, 0
    %805 = vmatprep.subr.mxu0 %v326
    %806 = vmatpush1.msra.mxu0 %v325
    %807 = vmatprep.subr.mxu0 %v328
    %808 = vmatpush1.msra.mxu0 %v327
    %809 = vmatprep.subr.mxu0 %v330
    %810 = vmatpush1.msra.mxu0 %v329
    %811 = vmatprep.subr.mxu0 %v332
    %812 = vmatpush1.msra.mxu0 %v331
    %813 = vmatprep.subr.mxu0 %v334
    %814 = vmatpush1.msra.mxu0 %v333
    %815 = vmatprep.subr.mxu0 %v336
    %816 = vmatpush1.msra.mxu0 %v335
    %817 = vmatprep.subr.mxu0 %v338
    %818 = vmatpush1.msra.mxu0 %v337
    %819 = vmatprep.subr.mxu0 %v340
    %820 = vmatpush1.msra.mxu0 %v339
    %821 = vmatprep.subr.mxu0 0.0
    %822 = vmatpush1.msra.mxu0 0.0
    %823 = vmatprep.subr.mxu0 0.0
    %824 = vmatpush1.msra.mxu0 0.0
    %825 = vmatprep.subr.mxu0 0.0
    %826 = vmatpush1.msra.mxu0 0.0
    %827 = vmatprep.subr.mxu0 0.0
    %828 = vmatpush1.msra.mxu0 0.0
    %829 = vmatprep.subr.mxu0 0.0
    %830 = vmatpush1.msra.mxu0 0.0
    %831 = vmatprep.subr.mxu0 0.0
    %832 = vmatpush1.msra.mxu0 0.0
    %833 = vmatprep.subr.mxu0 0.0
    %834 = vmatpush1.msra.mxu0 0.0
    %835 = vmatprep.subr.mxu0 0.0
    %836 = vmatpush1.msra.mxu0 0.0
    %837 = vmatprep.subr.mxu0 0.0
    %838 = vmatpush1.msra.mxu0 0.0
    %839 = vmatprep.subr.mxu0 0.0
    %840 = vmatpush1.msra.mxu0 0.0
    %841 = vmatprep.subr.mxu0 0.0
    %842 = vmatpush1.msra.mxu0 0.0
    %843 = vmatprep.subr.mxu0 0.0
    %844 = vmatpush1.msra.mxu0 0.0
    %845 = vmatprep.subr.mxu0 0.0
    %846 = vmatpush1.msra.mxu0 0.0
    %847 = vmatprep.subr.mxu0 0.0
    %848 = vmatpush1.msra.mxu0 0.0
    %849 = vmatprep.subr.mxu0 0.0
    %850 = vmatpush1.msra.mxu0 0.0
    %851 = vmatprep.subr.mxu0 0.0
    %852 = vmatpush1.msra.mxu0 0.0
    %853 = vmatprep.subr.mxu0 0.0
    %854 = vmatpush1.msra.mxu0 0.0
    %855 = vmatprep.subr.mxu0 0.0
    %856 = vmatpush1.msra.mxu0 0.0
    %857 = vmatprep.subr.mxu0 0.0
    %858 = vmatpush1.msra.mxu0 0.0
    %859 = vmatprep.subr.mxu0 0.0
    %860 = vmatpush1.msra.mxu0 0.0
    %861 = vmatprep.subr.mxu0 0.0
    %862 = vmatpush1.msra.mxu0 0.0
    %863 = vmatprep.subr.mxu0 0.0
    %864 = vmatpush1.msra.mxu0 0.0
    %865 = vmatprep.subr.mxu0 0.0
    %866 = vmatpush1.msra.mxu0 0.0
    %867 = vmatprep.subr.mxu0 0.0
    %868 = vmatpush1.msra.mxu0 0.0
    %869 = vmatprep.mubr.f32.mxu0 0.0
    %870 = vmatmul.mubr.f32.gmra.mrb[0].mxu0 %v803
    %v871 = vpop.f32.mrb[0].mxu0
    %v872 = vadd.f32 0.0, %v871
    %v873 = vpop.f32.mrb[0].mxu0
    %v874 = vadd.f32 0.0, %v873
    %875 = vdwg.mxu0
    %v876 = vadd.f32 %v301, %v872
    %v877 = vadd.f32 %v303, %v874
    %v878 = vxor.u32 %v876, 2147483648
    %v879 = vxor.u32 %v877, 2147483648
    %v880 = vmul.f32 %v878, 1.442695
    %v881 = vpow.pop %v880
    %v882 = vmul.f32 %v879, 1.442695
    %v883 = vpow.pop %v882
    %v884 = vadd.f32 %v881, 1.0
    %v885 = vadd.f32 %v883, 1.0
    %v886 = vrcp.pop %v884
    %v887 = vmul.f32 1.0, %v886
    %v888 = vrcp.pop %v885
    %v889 = vmul.f32 1.0, %v888
    %v890 = vtanh.pop %v877
    %v892 = vrot.slane %v792, 6
    %v894 = vmul.f32 %v887, %v892
    %896 = vrot.lane.b32.xlu0 %v890, 64
    %v897 = vpop.permute.xlu0 %896
    %v899 = vmul.f32 %v887, %v897
    %901 = vrot.lane.b32.xlu0 %v899, 64
    %v902 = vpop.permute.xlu0 %901
    %v904 = vadd.f32 %v894, %v902
    %v905 = vtanh.pop %v904
    %907 = vrot.lane.b32.xlu0 %v905, 64
    %v908 = vpop.permute.xlu0 %907
    %v910 = vmul.f32 %v889, %v908
    %v911 = vmax.f32 %v802, %v910
    %v913 = vsel %vm221, %v910, 0
    %915 = vmatprep.subr.mxu0 %v326
    %916 = vmatpush1.msra.mxu0 %v325
    %917 = vmatprep.subr.mxu0 %v328
    %918 = vmatpush1.msra.mxu0 %v327
    %919 = vmatprep.subr.mxu0 %v330
    %920 = vmatpush1.msra.mxu0 %v329
    %921 = vmatprep.subr.mxu0 %v332
    %922 = vmatpush1.msra.mxu0 %v331
    %923 = vmatprep.subr.mxu0 %v334
    %924 = vmatpush1.msra.mxu0 %v333
    %925 = vmatprep.subr.mxu0 %v336
    %926 = vmatpush1.msra.mxu0 %v335
    %927 = vmatprep.subr.mxu0 %v338
    %928 = vmatpush1.msra.mxu0 %v337
    %929 = vmatprep.subr.mxu0 %v340
    %930 = vmatpush1.msra.mxu0 %v339
    %931 = vmatprep.subr.mxu0 0.0
    %932 = vmatpush1.msra.mxu0 0.0
    %933 = vmatprep.subr.mxu0 0.0
    %934 = vmatpush1.msra.mxu0 0.0
    %935 = vmatprep.subr.mxu0 0.0
    %936 = vmatpush1.msra.mxu0 0.0
    %937 = vmatprep.subr.mxu0 0.0
    %938 = vmatpush1.msra.mxu0 0.0
    %939 = vmatprep.subr.mxu0 0.0
    %940 = vmatpush1.msra.mxu0 0.0
    %941 = vmatprep.subr.mxu0 0.0
    %942 = vmatpush1.msra.mxu0 0.0
    %943 = vmatprep.subr.mxu0 0.0
    %944 = vmatpush1.msra.mxu0 0.0
    %945 = vmatprep.subr.mxu0 0.0
    %946 = vmatpush1.msra.mxu0 0.0
    %947 = vmatprep.subr.mxu0 0.0
    %948 = vmatpush1.msra.mxu0 0.0
    %949 = vmatprep.subr.mxu0 0.0
    %950 = vmatpush1.msra.mxu0 0.0
    %951 = vmatprep.subr.mxu0 0.0
    %952 = vmatpush1.msra.mxu0 0.0
    %953 = vmatprep.subr.mxu0 0.0
    %954 = vmatpush1.msra.mxu0 0.0
    %955 = vmatprep.subr.mxu0 0.0
    %956 = vmatpush1.msra.mxu0 0.0
    %957 = vmatprep.subr.mxu0 0.0
    %958 = vmatpush1.msra.mxu0 0.0
    %959 = vmatprep.subr.mxu0 0.0
    %960 = vmatpush1.msra.mxu0 0.0
    %961 = vmatprep.subr.mxu0 0.0
    %962 = vmatpush1.msra.mxu0 0.0
    %963 = vmatprep.subr.mxu0 0.0
    %964 = vmatpush1.msra.mxu0 0.0
    %965 = vmatprep.subr.mxu0 0.0
    %966 = vmatpush1.msra.mxu0 0.0
    %967 = vmatprep.subr.mxu0 0.0
    %968 = vmatpush1.msra.mxu0 0.0
    %969 = vmatprep.subr.mxu0 0.0
    %970 = vmatpush1.msra.mxu0 0.0
    %971 = vmatprep.subr.mxu0 0.0
    %972 = vmatpush1.msra.mxu0 0.0
    %973 = vmatprep.subr.mxu0 0.0
    %974 = vmatpush1.msra.mxu0 0.0
    %975 = vmatprep.subr.mxu0 0.0
    %976 = vmatpush1.msra.mxu0 0.0
    %977 = vmatprep.subr.mxu0 0.0
    %978 = vmatpush1.msra.mxu0 0.0
    %979 = vmatprep.mubr.f32.mxu0 0.0
    %980 = vmatmul.mubr.f32.gmra.mrb[0].mxu0 %v913
    %v981 = vpop.f32.mrb[0].mxu0
    %v982 = vadd.f32 0.0, %v981
    %v983 = vpop.f32.mrb[0].mxu0
    %v984 = vadd.f32 0.0, %v983
    %985 = vdwg.mxu0
    %v988 = vrot.slane %v982, 6
    %v989 = vrot.slane %v984, 6
    %v992 = vadd.f32 %v301, %v988
    %v993 = vadd.f32 %v303, %v989
    %v994 = vxor.u32 %v992, 2147483648
    %v995 = vxor.u32 %v993, 2147483648
    %v996 = vmul.f32 %v994, 1.442695
    %v997 = vpow.pop %v996
    %v998 = vmul.f32 %v995, 1.442695
    %v999 = vpow.pop %v998
    %v1000 = vadd.f32 %v997, 1.0
    %v1001 = vadd.f32 %v999, 1.0
    %v1002 = vrcp.pop %v1000
    %v1003 = vmul.f32 1.0, %v1002
    %v1004 = vrcp.pop %v1001
    %v1005 = vmul.f32 1.0, %v1004
    %v1006 = vtanh.pop %v993
    %v1008 = vrot.slane %v904, 6
    %v1010 = vmul.f32 %v1003, %v1008
    %1012 = vrot.lane.b32.xlu0 %v1006, 64
    %v1013 = vpop.permute.xlu0 %1012
    %v1015 = vmul.f32 %v1003, %v1013
    %1017 = vrot.lane.b32.xlu0 %v1015, 64
    %v1018 = vpop.permute.xlu0 %1017
    %v1020 = vadd.f32 %v1010, %v1018
    %v1021 = vtanh.pop %v1020
    %1023 = vrot.lane.b32.xlu0 %v1021, 64
    %v1024 = vpop.permute.xlu0 %1023
    %v1026 = vmul.f32 %v1005, %v1024
    %v1028 = vrot.slane %v1026, 2
    %v1030 = vmax.f32 %v911, %v1028
    %v1031 = vsel %vm221, %v1028, 0
    %1033 = vmatprep.subr.mxu0 %v326
    %1034 = vmatpush1.msra.mxu0 %v325
    %1035 = vmatprep.subr.mxu0 %v328
    %1036 = vmatpush1.msra.mxu0 %v327
    %1037 = vmatprep.subr.mxu0 %v330
    %1038 = vmatpush1.msra.mxu0 %v329
    %1039 = vmatprep.subr.mxu0 %v332
    %1040 = vmatpush1.msra.mxu0 %v331
    %1041 = vmatprep.subr.mxu0 %v334
    %1042 = vmatpush1.msra.mxu0 %v333
    %1043 = vmatprep.subr.mxu0 %v336
    %1044 = vmatpush1.msra.mxu0 %v335
    %1045 = vmatprep.subr.mxu0 %v338
    %1046 = vmatpush1.msra.mxu0 %v337
    %1047 = vmatprep.subr.mxu0 %v340
    %1048 = vmatpush1.msra.mxu0 %v339
    %1049 = vmatprep.subr.mxu0 0.0
    %1050 = vmatpush1.msra.mxu0 0.0
    %1051 = vmatprep.subr.mxu0 0.0
    %1052 = vmatpush1.msra.mxu0 0.0
    %1053 = vmatprep.subr.mxu0 0.0
    %1054 = vmatpush1.msra.mxu0 0.0
    %1055 = vmatprep.subr.mxu0 0.0
    %1056 = vmatpush1.msra.mxu0 0.0
    %1057 = vmatprep.subr.mxu0 0.0
    %1058 = vmatpush1.msra.mxu0 0.0
    %1059 = vmatprep.subr.mxu0 0.0
    %1060 = vmatpush1.msra.mxu0 0.0
    %1061 = vmatprep.subr.mxu0 0.0
    %1062 = vmatpush1.msra.mxu0 0.0
    %1063 = vmatprep.subr.mxu0 0.0
    %1064 = vmatpush1.msra.mxu0 0.0
    %1065 = vmatprep.subr.mxu0 0.0
    %1066 = vmatpush1.msra.mxu0 0.0
    %1067 = vmatprep.subr.mxu0 0.0
    %1068 = vmatpush1.msra.mxu0 0.0
    %1069 = vmatprep.subr.mxu0 0.0
    %1070 = vmatpush1.msra.mxu0 0.0
    %1071 = vmatprep.subr.mxu0 0.0
    %1072 = vmatpush1.msra.mxu0 0.0
    %1073 = vmatprep.subr.mxu0 0.0
    %1074 = vmatpush1.msra.mxu0 0.0
    %1075 = vmatprep.subr.mxu0 0.0
    %1076 = vmatpush1.msra.mxu0 0.0
    %1077 = vmatprep.subr.mxu0 0.0
    %1078 = vmatpush1.msra.mxu0 0.0
    %1079 = vmatprep.subr.mxu0 0.0
    %1080 = vmatpush1.msra.mxu0 0.0
    %1081 = vmatprep.subr.mxu0 0.0
    %1082 = vmatpush1.msra.mxu0 0.0
    %1083 = vmatprep.subr.mxu0 0.0
    %1084 = vmatpush1.msra.mxu0 0.0
    %1085 = vmatprep.subr.mxu0 0.0
    %1086 = vmatpush1.msra.mxu0 0.0
    %1087 = vmatprep.subr.mxu0 0.0
    %1088 = vmatpush1.msra.mxu0 0.0
    %1089 = vmatprep.subr.mxu0 0.0
    %1090 = vmatpush1.msra.mxu0 0.0
    %1091 = vmatprep.subr.mxu0 0.0
    %1092 = vmatpush1.msra.mxu0 0.0
    %1093 = vmatprep.subr.mxu0 0.0
    %1094 = vmatpush1.msra.mxu0 0.0
    %1095 = vmatprep.subr.mxu0 0.0
    %1096 = vmatpush1.msra.mxu0 0.0
    %1097 = vmatprep.mubr.f32.mxu0 0.0
    %1098 = vmatmul.mubr.f32.gmra.mrb[0].mxu0 %v1031
    %v1099 = vpop.f32.mrb[0].mxu0
    %v1100 = vadd.f32 0.0, %v1099
    %v1101 = vpop.f32.mrb[0].mxu0
    %v1102 = vadd.f32 0.0, %v1101
    %1103 = vdwg.mxu0
    %v1106 = vrot.slane %v1100, 4
    %v1107 = vrot.slane %v1102, 4
    %v1110 = vadd.f32 %v301, %v1106
    %v1111 = vadd.f32 %v303, %v1107
    %v1112 = vxor.u32 %v1110, 2147483648
    %v1113 = vxor.u32 %v1111, 2147483648
    %v1114 = vmul.f32 %v1112, 1.442695
    %v1115 = vpow.pop %v1114
    %v1116 = vmul.f32 %v1113, 1.442695
    %v1117 = vpow.pop %v1116
    %v1118 = vadd.f32 %v1115, 1.0
    %v1119 = vadd.f32 %v1117, 1.0
    %v1120 = vrcp.pop %v1118
    %v1121 = vmul.f32 1.0, %v1120
    %v1122 = vrcp.pop %v1119
    %v1123 = vmul.f32 1.0, %v1122
    %v1124 = vtanh.pop %v1111
    %v1126 = vrot.slane %v1020, 6
    %v1128 = vmul.f32 %v1121, %v1126
    %1130 = vrot.lane.b32.xlu0 %v1124, 64
    %v1131 = vpop.permute.xlu0 %1130
    %v1133 = vmul.f32 %v1121, %v1131
    %1135 = vrot.lane.b32.xlu0 %v1133, 64
    %v1136 = vpop.permute.xlu0 %1135
    %v1138 = vadd.f32 %v1128, %v1136
    %v1139 = vtanh.pop %v1138
    %1141 = vrot.lane.b32.xlu0 %v1139, 64
    %v1142 = vpop.permute.xlu0 %1141
    %v1144 = vmul.f32 %v1123, %v1142
    %v1146 = vrot.slane %v1144, 4
    %v1148 = vmax.f32 %v1030, %v1146
    %v1149 = vsel %vm221, %v1146, 0
    %1151 = vmatprep.subr.mxu0 %v326
    %1152 = vmatpush1.msra.mxu0 %v325
    %1153 = vmatprep.subr.mxu0 %v328
    %1154 = vmatpush1.msra.mxu0 %v327
    %1155 = vmatprep.subr.mxu0 %v330
    %1156 = vmatpush1.msra.mxu0 %v329
    %1157 = vmatprep.subr.mxu0 %v332
    %1158 = vmatpush1.msra.mxu0 %v331
    %1159 = vmatprep.subr.mxu0 %v334
    %1160 = vmatpush1.msra.mxu0 %v333
    %1161 = vmatprep.subr.mxu0 %v336
    %1162 = vmatpush1.msra.mxu0 %v335
    %1163 = vmatprep.subr.mxu0 %v338
    %1164 = vmatpush1.msra.mxu0 %v337
    %1165 = vmatprep.subr.mxu0 %v340
    %1166 = vmatpush1.msra.mxu0 %v339
    %1167 = vmatprep.subr.mxu0 0.0
    %1168 = vmatpush1.msra.mxu0 0.0
    %1169 = vmatprep.subr.mxu0 0.0
    %1170 = vmatpush1.msra.mxu0 0.0
    %1171 = vmatprep.subr.mxu0 0.0
    %1172 = vmatpush1.msra.mxu0 0.0
    %1173 = vmatprep.subr.mxu0 0.0
    %1174 = vmatpush1.msra.mxu0 0.0
    %1175 = vmatprep.subr.mxu0 0.0
    %1176 = vmatpush1.msra.mxu0 0.0
    %1177 = vmatprep.subr.mxu0 0.0
    %1178 = vmatpush1.msra.mxu0 0.0
    %1179 = vmatprep.subr.mxu0 0.0
    %1180 = vmatpush1.msra.mxu0 0.0
    %1181 = vmatprep.subr.mxu0 0.0
    %1182 = vmatpush1.msra.mxu0 0.0
    %1183 = vmatprep.subr.mxu0 0.0
    %1184 = vmatpush1.msra.mxu0 0.0
    %1185 = vmatprep.subr.mxu0 0.0
    %1186 = vmatpush1.msra.mxu0 0.0
    %1187 = vmatprep.subr.mxu0 0.0
    %1188 = vmatpush1.msra.mxu0 0.0
    %1189 = vmatprep.subr.mxu0 0.0
    %1190 = vmatpush1.msra.mxu0 0.0
    %1191 = vmatprep.subr.mxu0 0.0
    %1192 = vmatpush1.msra.mxu0 0.0
    %1193 = vmatprep.subr.mxu0 0.0
    %1194 = vmatpush1.msra.mxu0 0.0
    %1195 = vmatprep.subr.mxu0 0.0
    %1196 = vmatpush1.msra.mxu0 0.0
    %1197 = vmatprep.subr.mxu0 0.0
    %1198 = vmatpush1.msra.mxu0 0.0
    %1199 = vmatprep.subr.mxu0 0.0
    %1200 = vmatpush1.msra.mxu0 0.0
    %1201 = vmatprep.subr.mxu0 0.0
    %1202 = vmatpush1.msra.mxu0 0.0
    %1203 = vmatprep.subr.mxu0 0.0
    %1204 = vmatpush1.msra.mxu0 0.0
    %1205 = vmatprep.subr.mxu0 0.0
    %1206 = vmatpush1.msra.mxu0 0.0
    %1207 = vmatprep.subr.mxu0 0.0
    %1208 = vmatpush1.msra.mxu0 0.0
    %1209 = vmatprep.subr.mxu0 0.0
    %1210 = vmatpush1.msra.mxu0 0.0
    %1211 = vmatprep.subr.mxu0 0.0
    %1212 = vmatpush1.msra.mxu0 0.0
    %1213 = vmatprep.subr.mxu0 0.0
    %1214 = vmatpush1.msra.mxu0 0.0
    %1215 = vmatprep.mubr.f32.mxu0 0.0
    %1216 = vmatmul.mubr.f32.gmra.mrb[0].mxu0 %v1149
    %v1217 = vpop.f32.mrb[0].mxu0
    %v1218 = vadd.f32 0.0, %v1217
    %v1219 = vpop.f32.mrb[0].mxu0
    %v1220 = vadd.f32 0.0, %v1219
    %1221 = vdwg.mxu0
    %v1224 = vrot.slane %v1218, 2
    %v1225 = vrot.slane %v1220, 2
    %v1228 = vadd.f32 %v301, %v1224
    %v1229 = vadd.f32 %v303, %v1225
    %v1230 = vxor.u32 %v1228, 2147483648
    %v1231 = vxor.u32 %v1229, 2147483648
    %v1232 = vmul.f32 %v1230, 1.442695
    %v1233 = vpow.pop %v1232
    %v1234 = vmul.f32 %v1231, 1.442695
    %v1235 = vpow.pop %v1234
    %v1236 = vadd.f32 %v1233, 1.0
    %v1237 = vadd.f32 %v1235, 1.0
    %v1238 = vrcp.pop %v1236
    %v1239 = vmul.f32 1.0, %v1238
    %v1240 = vrcp.pop %v1237
    %v1241 = vmul.f32 1.0, %v1240
    %v1242 = vtanh.pop %v1229
    %v1244 = vrot.slane %v1138, 6
    %v1246 = vmul.f32 %v1239, %v1244
    %1248 = vrot.lane.b32.xlu0 %v1242, 64
    %v1249 = vpop.permute.xlu0 %1248
    %v1251 = vmul.f32 %v1239, %v1249
    %1253 = vrot.lane.b32.xlu0 %v1251, 64
    %v1254 = vpop.permute.xlu0 %1253
    %v1256 = vadd.f32 %v1246, %v1254
    %v1257 = vtanh.pop %v1256
    %1259 = vrot.lane.b32.xlu0 %v1257, 64
    %v1260 = vpop.permute.xlu0 %1259
    %v1262 = vmul.f32 %v1241, %v1260
    %v1264 = vrot.slane %v1262, 6
    %v1266 = vmax.f32 %v1148, %v1264
    %v1267 = vld [vmem:[%s5] sm:$0xff]
    %v1268 = vld [vmem:[%s5 + $0x8] sm:$0xff]
    %v1269 = vld [vmem:[%s5 + $0x10] sm:$0xff]
    %v1270 = vld [vmem:[%s5 + $0x18] sm:$0xff]
    %v1271 = vld [vmem:[%s5 + $0x20] sm:$0xff]
    %v1272 = vld [vmem:[%s5 + $0x28] sm:$0xff]
    %v1273 = vld [vmem:[%s5 + $0x30] sm:$0xff]
    %v1274 = vld [vmem:[%s5 + $0x38] sm:$0xff]
    %v1275 = vld [vmem:[%s5 + $0x40] sm:$0xff]
    %v1276 = vld [vmem:[%s5 + $0x48] sm:$0xff]
    %v1277 = vld [vmem:[%s5 + $0x50] sm:$0xff]
    %v1278 = vld [vmem:[%s5 + $0x58] sm:$0xff]
    %v1280 = vsel %vm221, %v1266, 0
    %1282 = vmatprep.subr.mxu0 0.0
    %1283 = vmatpush1.msra.mxu0 %v1271
    %1284 = vmatprep.subr.mxu0 0.0
    %1285 = vmatpush1.msra.mxu0 %v1272
    %1286 = vmatprep.subr.mxu0 0.0
    %1287 = vmatpush1.msra.mxu0 %v1273
    %1288 = vmatprep.subr.mxu0 0.0
    %1289 = vmatpush1.msra.mxu0 %v1274
    %1290 = vmatprep.subr.mxu0 0.0
    %1291 = vmatpush1.msra.mxu0 %v1275
    %1292 = vmatprep.subr.mxu0 0.0
    %1293 = vmatpush1.msra.mxu0 %v1276
    %1294 = vmatprep.subr.mxu0 0.0
    %1295 = vmatpush1.msra.mxu0 %v1277
    %1296 = vmatprep.subr.mxu0 0.0
    %1297 = vmatpush1.msra.mxu0 %v1278
    %1298 = vmatprep.subr.mxu0 0.0
    %1299 = vmatpush1.msra.mxu0 0.0
    %1300 = vmatprep.subr.mxu0 0.0
    %1301 = vmatpush1.msra.mxu0 0.0
    %1302 = vmatprep.subr.mxu0 0.0
    %1303 = vmatpush1.msra.mxu0 0.0
    %1304 = vmatprep.subr.mxu0 0.0
    %1305 = vmatpush1.msra.mxu0 0.0
    %1306 = vmatprep.subr.mxu0 0.0
    %1307 = vmatpush1.msra.mxu0 0.0
    %1308 = vmatprep.subr.mxu0 0.0
    %1309 = vmatpush1.msra.mxu0 0.0
    %1310 = vmatprep.subr.mxu0 0.0
    %1311 = vmatpush1.msra.mxu0 0.0
    %1312 = vmatprep.subr.mxu0 0.0
    %1313 = vmatpush1.msra.mxu0 0.0
    %1314 = vmatprep.subr.mxu0 0.0
    %1315 = vmatpush1.msra.mxu0 0.0
    %1316 = vmatprep.subr.mxu0 0.0
    %1317 = vmatpush1.msra.mxu0 0.0
    %1318 = vmatprep.subr.mxu0 0.0
    %1319 = vmatpush1.msra.mxu0 0.0
    %1320 = vmatprep.subr.mxu0 0.0
    %1321 = vmatpush1.msra.mxu0 0.0
    %1322 = vmatprep.subr.mxu0 0.0
    %1323 = vmatpush1.msra.mxu0 0.0
    %1324 = vmatprep.subr.mxu0 0.0
    %1325 = vmatpush1.msra.mxu0 0.0
    %1326 = vmatprep.subr.mxu0 0.0
    %1327 = vmatpush1.msra.mxu0 0.0
    %1328 = vmatprep.subr.mxu0 0.0
    %1329 = vmatpush1.msra.mxu0 0.0
    %1330 = vmatprep.subr.mxu0 0.0
    %1331 = vmatpush1.msra.mxu0 0.0
    %1332 = vmatprep.subr.mxu0 0.0
    %1333 = vmatpush1.msra.mxu0 0.0
    %1334 = vmatprep.subr.mxu0 0.0
    %1335 = vmatpush1.msra.mxu0 0.0
    %1336 = vmatprep.subr.mxu0 0.0
    %1337 = vmatpush1.msra.mxu0 0.0
    %1338 = vmatprep.subr.mxu0 0.0
    %1339 = vmatpush1.msra.mxu0 0.0
    %1340 = vmatprep.subr.mxu0 0.0
    %1341 = vmatpush1.msra.mxu0 0.0
    %1342 = vmatprep.subr.mxu0 0.0
    %1343 = vmatpush1.msra.mxu0 0.0
    %1344 = vmatprep.subr.mxu0 0.0
    %1345 = vmatpush1.msra.mxu0 0.0
    %1346 = vmatprep.mubr.f32.mxu0 0.0
    %1347 = vmatmul.mubr.f32.gmra.mrb[0].mxu0 %v1280
    %v1348 = vpop.f32.mrb[0].mxu0
    %v1349 = vadd.f32 0.0, %v1348
    %v1350 = vpop.f32.mrb[0].mxu0
    %1351 = vdwg.mxu0
    %vm1352 = vcmask 261120
    %v1354 = vsel %vm1352, %v324, 0
    %1356 = vmatprep.subr.mxu0 0.0
    %1357 = vmatpush1.msra.mxu0 %v1267
    %1358 = vmatprep.subr.mxu0 0.0
    %1359 = vmatpush1.msra.mxu0 %v1268
    %1360 = vmatprep.subr.mxu0 0.0
    %1361 = vmatpush1.msra.mxu0 %v1269
    %1362 = vmatprep.subr.mxu0 0.0
    %1363 = vmatpush1.msra.mxu0 %v1270
    %1364 = vmatprep.subr.mxu0 0.0
    %1365 = vmatpush1.msra.mxu0 0.0
    %1366 = vmatprep.subr.mxu0 0.0
    %1367 = vmatpush1.msra.mxu0 0.0
    %1368 = vmatprep.subr.mxu0 0.0
    %1369 = vmatpush1.msra.mxu0 0.0
    %1370 = vmatprep.subr.mxu0 0.0
    %1371 = vmatpush1.msra.mxu0 0.0
    %1372 = vmatprep.subr.mxu0 0.0
    %1373 = vmatpush1.msra.mxu0 0.0
    %1374 = vmatprep.subr.mxu0 0.0
    %1375 = vmatpush1.msra.mxu0 0.0
    %1376 = vmatprep.subr.mxu0 0.0
    %1377 = vmatpush1.msra.mxu0 0.0
    %1378 = vmatprep.subr.mxu0 0.0
    %1379 = vmatpush1.msra.mxu0 0.0
    %1380 = vmatprep.subr.mxu0 0.0
    %1381 = vmatpush1.msra.mxu0 0.0
    %1382 = vmatprep.subr.mxu0 0.0
    %1383 = vmatpush1.msra.mxu0 0.0
    %1384 = vmatprep.subr.mxu0 0.0
    %1385 = vmatpush1.msra.mxu0 0.0
    %1386 = vmatprep.subr.mxu0 0.0
    %1387 = vmatpush1.msra.mxu0 0.0
    %1388 = vmatprep.subr.mxu0 0.0
    %1389 = vmatpush1.msra.mxu0 0.0
    %1390 = vmatprep.subr.mxu0 0.0
    %1391 = vmatpush1.msra.mxu0 0.0
    %1392 = vmatprep.subr.mxu0 0.0
    %1393 = vmatpush1.msra.mxu0 0.0
    %1394 = vmatprep.subr.mxu0 0.0
    %1395 = vmatpush1.msra.mxu0 0.0
    %1396 = vmatprep.subr.mxu0 0.0
    %1397 = vmatpush1.msra.mxu0 0.0
    %1398 = vmatprep.subr.mxu0 0.0
    %1399 = vmatpush1.msra.mxu0 0.0
    %1400 = vmatprep.subr.mxu0 0.0
    %1401 = vmatpush1.msra.mxu0 0.0
    %1402 = vmatprep.subr.mxu0 0.0
    %1403 = vmatpush1.msra.mxu0 0.0
    %1404 = vmatprep.subr.mxu0 0.0
    %1405 = vmatpush1.msra.mxu0 0.0
    %1406 = vmatprep.subr.mxu0 0.0
    %1407 = vmatpush1.msra.mxu0 0.0
    %1408 = vmatprep.subr.mxu0 0.0
    %1409 = vmatpush1.msra.mxu0 0.0
    %1410 = vmatprep.subr.mxu0 0.0
    %1411 = vmatpush1.msra.mxu0 0.0
    %1412 = vmatprep.subr.mxu0 0.0
    %1413 = vmatpush1.msra.mxu0 0.0
    %1414 = vmatprep.subr.mxu0 0.0
    %1415 = vmatpush1.msra.mxu0 0.0
    %1416 = vmatprep.subr.mxu0 0.0
    %1417 = vmatpush1.msra.mxu0 0.0
    %1418 = vmatprep.subr.mxu0 0.0
    %1419 = vmatpush1.msra.mxu0 0.0
    %1420 = vmatprep.mubr.f32.mxu0 0.0
    %1421 = vmatmul.mubr.f32.gmra.mrb[0].mxu0 %v1354
    %v1422 = vpop.f32.mrb[0].mxu0
    %v1423 = vadd.f32 %v1349, %v1422
    %v1424 = vpop.f32.mrb[0].mxu0
    %1425 = vdwg.mxu0
    %v1426 = vld [vmem:[%s6] sm:$0x1]
    %v1428 = vlaneseq
    %v1429 = vshrl.u32 %v1428, 7
    %v1430 = vsub.s32 0, %v1429
    %v1431 = vrot.slane %v1426, %v1430
    %v1433 = vadd.f32 %v1423, %v1431
    %vm1434 = vcmask 25600
    %v1435 = vsel %vm1434, %v1433, -inf
    %1436 = vmax.xlane.f32.xlu0 %v1435
    %v1437 = vpop.xlane.xlu0 %1436
    %v1438 = vsub.f32 %v1433, %v1437
    %v1439 = vmul.f32 %v1438, 1.442695
    %v1440 = vpow.pop %v1439
    %v1441 = vsel %vm1434, %v1440, 0.0
    %1442 = vadd.xlane.f32.xlu0 %v1441
    %v1443 = vpop.xlane.xlu0 %1442
    %v1444 = vlog2.pop %v1443
    %v1445 = vmul.f32 %v1444, 0.6931472
    %v1446 = vsub.f32 %v1438, %v1445
    %1447 = vst.msk [vmem:[#allocation8] sm:$0x3] %vm1434, %v1446
    // Predicated region
    $region30: #{textrcnn_forward.1} parent=1 // pred_check
      _
    $region31: #{textrcnn_forward.1} parent=1 // pred_check_branch
      %1449 = sbr.rel (0) target = $region33
    $region32: #{textrcnn_forward.1} parent=1 // pred_region
      %s1451 = ssub.s32 32, 32
      %1452 = vsyncadd [#allocation7], %s1451
      %s1454 = sshll.u32 [#allocation8], 4
      %s1455 = int_to_ptr.vmem [resolvable:$true] %s1454
      %1457 = dma.vmem_to_hbm [thread:$0]  %s1455, 32, %s7, [#allocation7]
    $region33: #{textrcnn_forward.1} parent=1 // pred_fallthru
      _
    // Predicated region
    $region34: #{textrcnn_forward.1} parent=1 // pred_check
      _
    $region35: #{textrcnn_forward.1} parent=1 // pred_check_branch
      %1459 = sbr.rel (0) target = $region37
    $region36: #{textrcnn_forward.1} parent=1 // pred_region
      %1460 = dma.done [#allocation7], 32
    $region37: #{textrcnn_forward.1} parent=1 // pred_fallthru
      _
    %1461 = vsyncpa [#allocation6], 1
    %1462 = vsyncpa [#allocation7], 1

</llo_original>
